<compile_context>
chip_gen: v7x
topology: tpu7x:2x2x1
jax: 0.10.0
libtpu: 0.0.40
codegen_flags: <defaults>
</compile_context>

<pallas_src>
import functools

import jax
import jax.numpy as jnp
from jax.experimental import pallas as pl
from jax.experimental.pallas import tpu as pltpu

DIM_OUT = 201          # hard-coded in mlp2.out_layer (nn.Linear(n_hidden, 201))
LN_EPS = 1e-5          # nn.LayerNorm default
PRELU_INIT = 0.25      # nn.PReLU default (single shared slope)


def _prelu(x, a):
    return jnp.where(x >= 0, x, a * x)


def _round_up(v, m):
    return -(-v // m) * m


def _pad2(a, rows, cols):
    a = jnp.asarray(a, jnp.float32)
    return jnp.pad(a, ((0, rows - a.shape[0]), (0, cols - a.shape[1])))


def _pad_row(v, cols):
    v = jnp.asarray(v, jnp.float32).reshape(1, -1)
    return jnp.pad(v, ((0, 0), (0, cols - v.shape[1])))


def _default_node_splits():
    """2 splits only on v7x (two TensorCores per chip); 1 elsewhere."""
    try:
        kind = jax.devices()[0].device_kind.lower()
    except Exception:
        return 1
    return 2 if ("v7" in kind or "7x" in kind) else 1


def _vmem_limit_bytes(tile_m, f_pad, h_pad, d_pad, g_pad, itm):
    """Scoped VMEM request derived from the actual per-step footprint."""
    streamed = 2 * (tile_m * f_pad * itm + tile_m * 4)                  # x tile + batch ids (dbl-buf)
    weights = 2 * (f_pad * h_pad + h_pad * h_pad + h_pad * d_pad) * itm  # resident weights (dbl-buf)
    vectors = 2 * 5 * h_pad * 4                                          # b1, b23, ln_w, ln_b, mask
    outblk = 2 * g_pad * d_pad * 4                                       # resident output accumulator
    interm = tile_m * (2 * h_pad + d_pad) * 4 + g_pad * tile_m * 4       # f32 temporaries + one-hot
    total = streamed + weights + vectors + outblk + interm
    return int(min(max(2 * total, 16 * 1024 * 1024), 48 * 1024 * 1024))


def mlp2_kernel(x_ref, batch_ref,
                w1_ref, b1_ref, w23_ref, b23_ref,
                lnw_ref, lnb_ref, mask_ref,
                w4_ref,
                a1_ref, a2_ref,
                out_ref, *, inv_h):
    """One (split, node-tile) grid step; accumulates into the resident output."""

    @pl.when(pl.program_id(1) == 0)
    def _init():
        out_ref[...] = jnp.zeros_like(out_ref)

    cdt = w1_ref.dtype                       # compute dtype fed to the MXU
    a1 = a1_ref[0, 0]                        # PReLU slopes from SMEM (scalar path)
    a2 = a2_ref[0, 0]

    # --- Encoder.node_encoder + first out_layer Linear, W2@W3 pre-folded ---
    h = jnp.dot(x_ref[...], w1_ref[...],
                preferred_element_type=jnp.float32) + b1_ref[...]
    h = _prelu(h, a1)
    y = jnp.dot(h.astype(cdt), w23_ref[...],
                preferred_element_type=jnp.float32) + b23_ref[...]

    # --- LayerNorm over the real hidden features only ---
    # Padded columns of y are exactly 0, so the mean needs no mask; the
    # precomputed (1, h_pad) mask zeroes their (0 - mean) variance contribution.
    mask = mask_ref[...]
    mean = jnp.sum(y, axis=-1, keepdims=True) * inv_h
    diff = (y - mean) * mask
    var = jnp.sum(diff * diff, axis=-1, keepdims=True) * inv_h
    y = diff * jax.lax.rsqrt(var + LN_EPS)
    y = y * lnw_ref[...] + lnb_ref[...]
    y = _prelu(y, a2)

    # Final Linear without bias (b4 is added per-graph in the wrapper).
    dos = jnp.dot(y.astype(cdt), w4_ref[...],
                  preferred_element_type=jnp.float32)            # [TM, Dpad] f32

    # --- scatter_sum(dos, batch) as a one-hot matmul into the accumulator ---
    seg = batch_ref[...]                                         # [1, TM] int32 (-1 = pad)
    g_pad = out_ref.shape[1]
    gids = jax.lax.broadcasted_iota(jnp.int32, (g_pad, seg.shape[1]), 0)
    one_hot = (gids == seg).astype(jnp.float32)                  # [G_pad, TM]
    contrib = jnp.dot(one_hot, dos,
                      preferred_element_type=jnp.float32)        # [G_pad, Dpad]
    out_ref[...] += contrib[jnp.newaxis]


def mlp2_forward(x, batch, params, num_graphs, *,
                 tile_m=None, num_node_splits=None,
                 compute_dtype=jnp.bfloat16):
    """x: [N, n_atom_feats] f32, batch: [N] int32 graph ids in [0, num_graphs).

    Returns [num_graphs, 201] f32.  Graph ids outside [0, num_graphs) are
    dropped (matches jax.ops.segment_sum semantics).
    """
    n, f = x.shape
    h_real = params["w1"].shape[1]
    d_real = params["w4"].shape[1]           # 201

    n_splits = _default_node_splits() if num_node_splits is None else max(int(num_node_splits), 1)

    # Lane-friendly padded sizes.
    f_pad = _round_up(f, 128)
    h_pad = _round_up(h_real, 128)
    d_pad = _round_up(d_real, 128)            # 201 -> 256
    g_pad = _round_up(max(num_graphs, 1), 8)

    if tile_m is None:
        per_split = -(-max(n, 1) // n_splits)
        tile_m = min(1024, _round_up(per_split, 128))
    tile_m = _round_up(max(tile_m, 128), 128)
    n_pad = _round_up(max(n, 1), tile_m * n_splits)
    tiles_per_split = n_pad // (tile_m * n_splits)

    cdt = jnp.dtype(compute_dtype)
    itm = cdt.itemsize

    # Wrapper-side padding, W2@W3 fold (in f32), and dtype casts.  Biases / LN
    # params stay f32 so they are applied to f32 accumulators.
    x_p = _pad2(x, n_pad, f_pad).astype(cdt)
    seg = jnp.full((1, n_pad), -1, jnp.int32).at[0, :n].set(batch.astype(jnp.int32))

    w2f = jnp.asarray(params["w2"], jnp.float32)
    w3f = jnp.asarray(params["w3"], jnp.float32)
    w23_real = jnp.dot(w2f, w3f)                                        # [h, h] f32
    b23_real = jnp.dot(jnp.asarray(params["b2"], jnp.float32), w3f) \
        + jnp.asarray(params["b3"], jnp.float32)

    w1 = _pad2(params["w1"], f_pad, h_pad).astype(cdt)
    w23 = _pad2(w23_real, h_pad, h_pad).astype(cdt)
    w4 = _pad2(params["w4"], h_pad, d_pad).astype(cdt)
    b1 = _pad_row(params["b1"], h_pad)
    b23 = _pad_row(b23_real, h_pad)
    lnw = _pad_row(params["ln_w"], h_pad)
    lnb = _pad_row(params["ln_b"], h_pad)
    ln_mask = _pad_row(jnp.ones((h_real,), jnp.float32), h_pad)
    a1 = jnp.asarray(params["a1"], jnp.float32).reshape(1, 1)
    a2 = jnp.asarray(params["a2"], jnp.float32).reshape(1, 1)

    tps = tiles_per_split

    def const2(shape):
        return pl.BlockSpec(shape, lambda s, t: (0, 0))      # resident block

    smem_spec = pl.BlockSpec(memory_space=pltpu.MemorySpace.SMEM)

    in_specs = [
        pl.BlockSpec((tile_m, f_pad), lambda s, t: (s * tps + t, 0)),   # x tile
        pl.BlockSpec((1, tile_m), lambda s, t: (0, s * tps + t)),       # batch ids
        const2((f_pad, h_pad)), const2((1, h_pad)),                     # w1, b1
        const2((h_pad, h_pad)), const2((1, h_pad)),                     # w23, b23
        const2((1, h_pad)), const2((1, h_pad)), const2((1, h_pad)),     # ln_w, ln_b, mask
        const2((h_pad, d_pad)),                                         # w4
        smem_spec, smem_spec,                                           # a1, a2
    ]
    out_spec = pl.BlockSpec((1, g_pad, d_pad), lambda s, t: (s, 0, 0))

    mm_cols = f_pad * h_pad + h_pad * h_pad + h_pad * d_pad + g_pad * d_pad
    cost = pl.CostEstimate(
        flops=2 * n_pad * mm_cols,
        transcendentals=n_pad,                     # one rsqrt per node row
        bytes_accessed=(n_pad * f_pad * itm + n_pad * 4
                        + (f_pad * h_pad + h_pad * h_pad + h_pad * d_pad) * itm
                        + 5 * h_pad * 4
                        + n_splits * g_pad * d_pad * 4))

    kernel = functools.partial(mlp2_kernel, inv_h=float(1.0 / h_real))
    out_padded = pl.pallas_call(
        kernel,
        out_shape=jax.ShapeDtypeStruct((n_splits, g_pad, d_pad), jnp.float32),
        grid=(n_splits, tiles_per_split),
        in_specs=in_specs,
        out_specs=out_spec,
        compiler_params=pltpu.CompilerParams(
            dimension_semantics=("parallel", "arbitrary"),
            vmem_limit_bytes=_vmem_limit_bytes(tile_m, f_pad, h_pad, d_pad, g_pad, itm)),
        cost_estimate=cost,
    )(x_p, seg, w1, b1, w23, b23, lnw, lnb, ln_mask, w4, a1, a2)

    # Sum per-split partials, strip padding, add the hoisted b4 per graph.
    out = jnp.sum(out_padded, axis=0)[:num_graphs, :d_real]
    counts = jax.ops.segment_sum(jnp.ones((n,), jnp.float32),
                                 batch.astype(jnp.int32), num_segments=num_graphs)
    b4 = jnp.asarray(params["b4"], jnp.float32)
    return out + counts[:, None] * b4[None, :]


def make_params(key, n_atom_feats, n_hidden, dim_out=DIM_OUT):
    """Synthetic parameters; Linear weights stored pre-transposed as [in, out]."""
    ks = jax.random.split(key, 8)
    s = 0.1
    return {
        "w1": s * jax.random.normal(ks[0], (n_atom_feats, n_hidden), jnp.float32),
        "b1": s * jax.random.normal(ks[1], (n_hidden,), jnp.float32),
        "a1": jnp.full((), PRELU_INIT, jnp.float32),
        "w2": s * jax.random.normal(ks[2], (n_hidden, n_hidden), jnp.float32),
        "b2": s * jax.random.normal(ks[3], (n_hidden,), jnp.float32),
        "w3": s * jax.random.normal(ks[4], (n_hidden, n_hidden), jnp.float32),
        "b3": s * jax.random.normal(ks[5], (n_hidden,), jnp.float32),
        "ln_w": jnp.ones((n_hidden,), jnp.float32),
        "ln_b": jnp.zeros((n_hidden,), jnp.float32),
        "a2": jnp.full((), PRELU_INIT, jnp.float32),
        "w4": s * jax.random.normal(ks[6], (n_hidden, dim_out), jnp.float32),
        "b4": s * jax.random.normal(ks[7], (dim_out,), jnp.float32),
    }


def mlp2_reference(x, batch, params, num_graphs, compute_dtype=jnp.float32):
    """Pure-JAX reference (unfused Linears, per-node b4, f32 scatter)."""
    cdt = jnp.dtype(compute_dtype)

    def mm(a, w):
        return jnp.dot(a.astype(cdt), w.astype(cdt),
                       preferred_element_type=jnp.float32)

    h = mm(x, params["w1"]) + params["b1"][None, :]
    h = _prelu(h, params["a1"])
    h = mm(h, params["w2"]) + params["b2"][None, :]
    y = mm(h, params["w3"]) + params["b3"][None, :]
    mean = jnp.mean(y, axis=-1, keepdims=True)
    var = jnp.mean((y - mean) ** 2, axis=-1, keepdims=True)
    y = (y - mean) * jax.lax.rsqrt(var + LN_EPS)
    y = y * params["ln_w"][None, :] + params["ln_b"][None, :]
    y = _prelu(y, params["a2"])
    dos1 = mm(y, params["w4"]) + params["b4"][None, :]
    return jax.ops.segment_sum(dos1, batch, num_segments=num_graphs)


if __name__ == "__main__":
    n_nodes = 300
    n_atom_feats = 8
    n_hidden = 32
    num_graphs = 3

    key = jax.random.PRNGKey(0)
    kx, kp = jax.random.split(key)
    x = jax.random.normal(kx, (n_nodes, n_atom_feats), jnp.float32)
    batch = jnp.concatenate([
        jnp.zeros((90,), jnp.int32),
        jnp.ones((110,), jnp.int32),
        jnp.full((100,), 2, jnp.int32),
    ])
    params = make_params(kp, n_atom_feats, n_hidden)

    # f32 path with a forced small tile and 2-way split so the test exercises
    # multi-tile accumulation, the split axis, and padded (batch id = -1) rows:
    # N=300 -> padded 512, grid (2, 2).  Strict check of structure (W23 fold,
    # masked LayerNorm, one-hot scatter, hoisted b4).
    out_f32 = mlp2_forward(x, batch, params, num_graphs,
                           tile_m=128, num_node_splits=2,
                           compute_dtype=jnp.float32)
    out_f32 = jax.block_until_ready(out_f32)
    ref_f32 = mlp2_reference(x, batch, params, num_graphs,
                             compute_dtype=jnp.float32)
    assert out_f32.shape == (num_graphs, DIM_OUT)
    assert jnp.allclose(out_f32, ref_f32, atol=1e-3, rtol=1e-3), \
        "f32 mismatch vs reference"

    # bf16 fast path with adaptive defaults (tile_m / splits chosen per device,
    # MXU-native operands, f32 accumulation).  Looser tolerance: the kernel
    # folds W2@W3 and keeps the scatter in f32, the reference does not.
    out_bf16 = mlp2_forward(x, batch, params, num_graphs,
                            compute_dtype=jnp.bfloat16)
    out_bf16 = jax.block_until_ready(out_bf16)
    ref_bf16 = mlp2_reference(x, batch, params, num_graphs,
                              compute_dtype=jnp.bfloat16)
    assert out_bf16.shape == (num_graphs, DIM_OUT)
    assert jnp.allclose(out_bf16, ref_bf16, atol=1.5e-1, rtol=5e-2), \
        "bf16 mismatch vs reference"

    print("KERNEL_OK")
</pallas_src>

<mosaic_0001>
module attributes {stable_mosaic.version = 11 : i64} {
  func.func @mlp2_kernel(%arg0: i32, %arg1: i32, %arg2: memref<128x128xf32, #tpu.memory_space<vmem>>, %arg3: memref<1x128xi32, #tpu.memory_space<vmem>>, %arg4: memref<128x128xf32, #tpu.memory_space<vmem>>, %arg5: memref<1x128xf32, #tpu.memory_space<vmem>>, %arg6: memref<128x128xf32, #tpu.memory_space<vmem>>, %arg7: memref<1x128xf32, #tpu.memory_space<vmem>>, %arg8: memref<1x128xf32, #tpu.memory_space<vmem>>, %arg9: memref<1x128xf32, #tpu.memory_space<vmem>>, %arg10: memref<1x128xf32, #tpu.memory_space<vmem>>, %arg11: memref<128x256xf32, #tpu.memory_space<vmem>>, %arg12: memref<1x1xf32, #tpu.memory_space<smem>>, %arg13: memref<1x1xf32, #tpu.memory_space<smem>>, %arg14: memref<1x8x256xf32, #tpu.memory_space<vmem>>) attributes {dimension_semantics = [#tpu.dimension_semantics<parallel>, #tpu.dimension_semantics<arbitrary>], iteration_bounds = array<i64: 2, 2>, scalar_prefetch = 0 : i64, scratch_operands = 0 : i64, tpu.core_type = #tpu.core_type<tc>, window_params = [{transform_indices = @transform_0, window_bounds = array<i64: 128, 128>}, {transform_indices = @transform_1, window_bounds = array<i64: 1, 128>}, {pipeline_mode = #tpu.pipeline_mode<synchronous>, transform_indices = @transform_2, window_bounds = array<i64: 128, 128>}, {pipeline_mode = #tpu.pipeline_mode<synchronous>, transform_indices = @transform_3, window_bounds = array<i64: 1, 128>}, {pipeline_mode = #tpu.pipeline_mode<synchronous>, transform_indices = @transform_4, window_bounds = array<i64: 128, 128>}, {pipeline_mode = #tpu.pipeline_mode<synchronous>, transform_indices = @transform_5, window_bounds = array<i64: 1, 128>}, {pipeline_mode = #tpu.pipeline_mode<synchronous>, transform_indices = @transform_6, window_bounds = array<i64: 1, 128>}, {pipeline_mode = #tpu.pipeline_mode<synchronous>, transform_indices = @transform_7, window_bounds = array<i64: 1, 128>}, {pipeline_mode = #tpu.pipeline_mode<synchronous>, transform_indices = @transform_8, window_bounds = array<i64: 1, 128>}, {pipeline_mode = #tpu.pipeline_mode<synchronous>, transform_indices = @transform_9, window_bounds = array<i64: 128, 256>}, {transform_indices = @transform_10, window_bounds = array<i64: 1, 1>}, {transform_indices = @transform_11, window_bounds = array<i64: 1, 1>}, {transform_indices = @transform_12, window_bounds = array<i64: 1, 8, 256>}]} {
    %c0_i32 = arith.constant 0 : i32
    %0 = arith.cmpi eq, %arg1, %c0_i32 : i32
    %1 = arith.extui %0 : i1 to i32
    %c0_i32_0 = arith.constant 0 : i32
    %2 = arith.cmpi ne, %1, %c0_i32_0 : i32
    scf.if %2 {
      %cst_40 = arith.constant 0.000000e+00 : f32
      %64 = vector.broadcast %cst_40 : f32 to vector<1x8x256xf32>
      %c0_41 = arith.constant 0 : index
      %c0_42 = arith.constant 0 : index
      %c0_43 = arith.constant 0 : index
      %65 = vector.load %arg14[%c0_41, %c0_42, %c0_43] : memref<1x8x256xf32, #tpu.memory_space<vmem>>, vector<1x8x256xf32>
      tpu.vector_store %arg14[%c0_41, %c0_42, %c0_43], %64 {strides = array<i32>} : memref<1x8x256xf32, #tpu.memory_space<vmem>>, vector<1x8x256xf32>,
    } else {
    }
    %c0 = arith.constant 0 : index
    %c0_1 = arith.constant 0 : index
    %3 = memref.load %arg12[%c0, %c0_1] : memref<1x1xf32, #tpu.memory_space<smem>>
    %c0_2 = arith.constant 0 : index
    %c0_3 = arith.constant 0 : index
    %4 = memref.load %arg13[%c0_2, %c0_3] : memref<1x1xf32, #tpu.memory_space<smem>>
    %c0_4 = arith.constant 0 : index
    %c0_5 = arith.constant 0 : index
    %5 = vector.load %arg2[%c0_4, %c0_5] : memref<128x128xf32, #tpu.memory_space<vmem>>, vector<128x128xf32>
    %c0_6 = arith.constant 0 : index
    %c0_7 = arith.constant 0 : index
    %6 = vector.load %arg4[%c0_6, %c0_7] : memref<128x128xf32, #tpu.memory_space<vmem>>, vector<128x128xf32>
    %cst = arith.constant dense<0.000000e+00> : vector<128x128xf32>
    %7 = tpu.matmul %5, %6, %cst {dimension_numbers = #tpu.dot_dimension_numbers<[1], [0], [0], [1], [0, 0, 1, 1], [], []>} : vector<128x128xf32>, vector<128x128xf32>, vector<128x128xf32> -> vector<128x128xf32>
    %c0_8 = arith.constant 0 : index
    %c0_9 = arith.constant 0 : index
    %8 = vector.load %arg5[%c0_8, %c0_9] : memref<1x128xf32, #tpu.memory_space<vmem>>, vector<1x128xf32>
    %9 = vector.broadcast %8 : vector<1x128xf32> to vector<128x128xf32>
    %10 = arith.addf %7, %9 : vector<128x128xf32>
    %cst_10 = arith.constant 0.000000e+00 : f32
    %11 = vector.broadcast %cst_10 : f32 to vector<128x128xf32>
    %12 = arith.cmpf oge, %10, %11 : vector<128x128xf32>
    %13 = vector.broadcast %3 : f32 to vector<128x128xf32>
    %14 = arith.mulf %13, %10 : vector<128x128xf32>
    %15 = arith.select %12, %10, %14 : vector<128x128xi1>, vector<128x128xf32>
    %c0_11 = arith.constant 0 : index
    %c0_12 = arith.constant 0 : index
    %16 = vector.load %arg6[%c0_11, %c0_12] : memref<128x128xf32, #tpu.memory_space<vmem>>, vector<128x128xf32>
    %cst_13 = arith.constant dense<0.000000e+00> : vector<128x128xf32>
    %17 = tpu.matmul %15, %16, %cst_13 {dimension_numbers = #tpu.dot_dimension_numbers<[1], [0], [0], [1], [0, 0, 1, 1], [], []>} : vector<128x128xf32>, vector<128x128xf32>, vector<128x128xf32> -> vector<128x128xf32>
    %c0_14 = arith.constant 0 : index
    %c0_15 = arith.constant 0 : index
    %18 = vector.load %arg7[%c0_14, %c0_15] : memref<1x128xf32, #tpu.memory_space<vmem>>, vector<1x128xf32>
    %19 = vector.broadcast %18 : vector<1x128xf32> to vector<128x128xf32>
    %20 = arith.addf %17, %19 : vector<128x128xf32>
    %c0_16 = arith.constant 0 : index
    %c0_17 = arith.constant 0 : index
    %21 = vector.load %arg10[%c0_16, %c0_17] : memref<1x128xf32, #tpu.memory_space<vmem>>, vector<1x128xf32>
    %cst_18 = arith.constant dense<0.000000e+00> : vector<128xf32>
    %22 = vector.multi_reduction <add>, %20, %cst_18 [1] : vector<128x128xf32> to vector<128xf32>
    %23 = vector.shape_cast %22 : vector<128xf32> to vector<128x1xf32>
    %cst_19 = arith.constant 3.125000e-02 : f32
    %24 = vector.broadcast %cst_19 : f32 to vector<128x1xf32>
    %25 = arith.mulf %23, %24 : vector<128x1xf32>
    %26 = vector.broadcast %25 : vector<128x1xf32> to vector<128x128xf32>
    %27 = arith.subf %20, %26 : vector<128x128xf32>
    %28 = vector.broadcast %21 : vector<1x128xf32> to vector<128x128xf32>
    %29 = arith.mulf %27, %28 : vector<128x128xf32>
    %30 = arith.mulf %29, %29 : vector<128x128xf32>
    %cst_20 = arith.constant dense<0.000000e+00> : vector<128xf32>
    %31 = vector.multi_reduction <add>, %30, %cst_20 [1] : vector<128x128xf32> to vector<128xf32>
    %32 = vector.shape_cast %31 : vector<128xf32> to vector<128x1xf32>
    %cst_21 = arith.constant 3.125000e-02 : f32
    %33 = vector.broadcast %cst_21 : f32 to vector<128x1xf32>
    %34 = arith.mulf %32, %33 : vector<128x1xf32>
    %cst_22 = arith.constant 9.99999974E-6 : f32
    %35 = vector.broadcast %cst_22 : f32 to vector<128x1xf32>
    %36 = arith.addf %34, %35 : vector<128x1xf32>
    %37 = math.rsqrt %36 : vector<128x1xf32>
    %38 = vector.broadcast %37 : vector<128x1xf32> to vector<128x128xf32>
    %39 = arith.mulf %29, %38 : vector<128x128xf32>
    %c0_23 = arith.constant 0 : index
    %c0_24 = arith.constant 0 : index
    %40 = vector.load %arg8[%c0_23, %c0_24] : memref<1x128xf32, #tpu.memory_space<vmem>>, vector<1x128xf32>
    %41 = vector.broadcast %40 : vector<1x128xf32> to vector<128x128xf32>
    %42 = arith.mulf %39, %41 : vector<128x128xf32>
    %c0_25 = arith.constant 0 : index
    %c0_26 = arith.constant 0 : index
    %43 = vector.load %arg9[%c0_25, %c0_26] : memref<1x128xf32, #tpu.memory_space<vmem>>, vector<1x128xf32>
    %44 = vector.broadcast %43 : vector<1x128xf32> to vector<128x128xf32>
    %45 = arith.addf %42, %44 : vector<128x128xf32>
    %cst_27 = arith.constant 0.000000e+00 : f32
    %46 = vector.broadcast %cst_27 : f32 to vector<128x128xf32>
    %47 = arith.cmpf oge, %45, %46 : vector<128x128xf32>
    %48 = vector.broadcast %4 : f32 to vector<128x128xf32>
    %49 = arith.mulf %48, %45 : vector<128x128xf32>
    %50 = arith.select %47, %45, %49 : vector<128x128xi1>, vector<128x128xf32>
    %c0_28 = arith.constant 0 : index
    %c0_29 = arith.constant 0 : index
    %51 = vector.load %arg11[%c0_28, %c0_29] : memref<128x256xf32, #tpu.memory_space<vmem>>, vector<128x256xf32>
    %cst_30 = arith.constant dense<0.000000e+00> : vector<128x256xf32>
    %52 = tpu.matmul %50, %51, %cst_30 {dimension_numbers = #tpu.dot_dimension_numbers<[1], [0], [0], [1], [0, 0, 1, 1], [], []>} : vector<128x128xf32>, vector<128x256xf32>, vector<128x256xf32> -> vector<128x256xf32>
    %c0_31 = arith.constant 0 : index
    %c0_32 = arith.constant 0 : index
    %53 = vector.load %arg3[%c0_31, %c0_32] : memref<1x128xi32, #tpu.memory_space<vmem>>, vector<1x128xi32>
    %54 = tpu.iota {dimensions = array<i32: 0>} : vector<8x128xi32>
    %55 = vector.broadcast %53 : vector<1x128xi32> to vector<8x128xi32>
    %56 = arith.cmpi eq, %54, %55 : vector<8x128xi32>
    %57 = arith.extui %56 : vector<8x128xi1> to vector<8x128xi32>
    %58 = arith.sitofp %57 : vector<8x128xi32> to vector<8x128xf32>
    %cst_33 = arith.constant dense<0.000000e+00> : vector<8x256xf32>
    %59 = tpu.matmul %58, %52, %cst_33 {dimension_numbers = #tpu.dot_dimension_numbers<[1], [0], [0], [1], [0, 0, 1, 1], [], []>} : vector<8x128xf32>, vector<128x256xf32>, vector<8x256xf32> -> vector<8x256xf32>
    %c0_34 = arith.constant 0 : index
    %c0_35 = arith.constant 0 : index
    %c0_36 = arith.constant 0 : index
    %60 = vector.load %arg14[%c0_34, %c0_35, %c0_36] : memref<1x8x256xf32, #tpu.memory_space<vmem>>, vector<1x8x256xf32>
    %61 = vector.shape_cast %59 : vector<8x256xf32> to vector<1x8x256xf32>
    %62 = arith.addf %60, %61 : vector<1x8x256xf32>
    %c0_37 = arith.constant 0 : index
    %c0_38 = arith.constant 0 : index
    %c0_39 = arith.constant 0 : index
    %63 = vector.load %arg14[%c0_37, %c0_38, %c0_39] : memref<1x8x256xf32, #tpu.memory_space<vmem>>, vector<1x8x256xf32>
    tpu.vector_store %arg14[%c0_37, %c0_38, %c0_39], %62 {strides = array<i32>} : memref<1x8x256xf32, #tpu.memory_space<vmem>>, vector<1x8x256xf32>,
    return
  }
  func.func @transform_0(%arg0: i32, %arg1: i32) -> (i32, i32) {
    %c2_i32 = arith.constant 2 : i32
    %0 = arith.muli %arg0, %c2_i32 : i32
    %1 = arith.addi %0, %arg1 : i32
    %c0_i32 = arith.constant 0 : i32
    %c0_i32_0 = arith.constant 0 : i32
    return %1, %c0_i32 : i32, i32
  }
  func.func @transform_1(%arg0: i32, %arg1: i32) -> (i32, i32) {
    %c2_i32 = arith.constant 2 : i32
    %0 = arith.muli %arg0, %c2_i32 : i32
    %1 = arith.addi %0, %arg1 : i32
    %c0_i32 = arith.constant 0 : i32
    %c0_i32_0 = arith.constant 0 : i32
    return %c0_i32, %1 : i32, i32
  }
  func.func @transform_2(%arg0: i32, %arg1: i32) -> (i32, i32) {
    %c0_i32 = arith.constant 0 : i32
    %c0_i32_0 = arith.constant 0 : i32
    %c0_i32_1 = arith.constant 0 : i32
    return %c0_i32, %c0_i32_0 : i32, i32
  }
  func.func @transform_3(%arg0: i32, %arg1: i32) -> (i32, i32) {
    %c0_i32 = arith.constant 0 : i32
    %c0_i32_0 = arith.constant 0 : i32
    %c0_i32_1 = arith.constant 0 : i32
    return %c0_i32, %c0_i32_0 : i32, i32
  }
  func.func @transform_4(%arg0: i32, %arg1: i32) -> (i32, i32) {
    %c0_i32 = arith.constant 0 : i32
    %c0_i32_0 = arith.constant 0 : i32
    %c0_i32_1 = arith.constant 0 : i32
    return %c0_i32, %c0_i32_0 : i32, i32
  }
  func.func @transform_5(%arg0: i32, %arg1: i32) -> (i32, i32) {
    %c0_i32 = arith.constant 0 : i32
    %c0_i32_0 = arith.constant 0 : i32
    %c0_i32_1 = arith.constant 0 : i32
    return %c0_i32, %c0_i32_0 : i32, i32
  }
  func.func @transform_6(%arg0: i32, %arg1: i32) -> (i32, i32) {
    %c0_i32 = arith.constant 0 : i32
    %c0_i32_0 = arith.constant 0 : i32
    %c0_i32_1 = arith.constant 0 : i32
    return %c0_i32, %c0_i32_0 : i32, i32
  }
  func.func @transform_7(%arg0: i32, %arg1: i32) -> (i32, i32) {
    %c0_i32 = arith.constant 0 : i32
    %c0_i32_0 = arith.constant 0 : i32
    %c0_i32_1 = arith.constant 0 : i32
    return %c0_i32, %c0_i32_0 : i32, i32
  }
  func.func @transform_8(%arg0: i32, %arg1: i32) -> (i32, i32) {
    %c0_i32 = arith.constant 0 : i32
    %c0_i32_0 = arith.constant 0 : i32
    %c0_i32_1 = arith.constant 0 : i32
    return %c0_i32, %c0_i32_0 : i32, i32
  }
  func.func @transform_9(%arg0: i32, %arg1: i32) -> (i32, i32) {
    %c0_i32 = arith.constant 0 : i32
    %c0_i32_0 = arith.constant 0 : i32
    %c0_i32_1 = arith.constant 0 : i32
    return %c0_i32, %c0_i32_0 : i32, i32
  }
  func.func @transform_10(%arg0: i32, %arg1: i32) -> (i32, i32) {
    %c0_i32 = arith.constant 0 : i32
    %c0_i32_0 = arith.constant 0 : i32
    %c0_i32_1 = arith.constant 0 : i32
    return %c0_i32, %c0_i32_0 : i32, i32
  }
  func.func @transform_11(%arg0: i32, %arg1: i32) -> (i32, i32) {
    %c0_i32 = arith.constant 0 : i32
    %c0_i32_0 = arith.constant 0 : i32
    %c0_i32_1 = arith.constant 0 : i32
    return %c0_i32, %c0_i32_0 : i32, i32
  }
  func.func @transform_12(%arg0: i32, %arg1: i32) -> (i32, i32, i32) {
    %c0_i32 = arith.constant 0 : i32
    %c0_i32_0 = arith.constant 0 : i32
    %c0_i32_1 = arith.constant 0 : i32
    return %arg0, %c0_i32, %c0_i32_0 : i32, i32, i32
  }
}

</mosaic_0001>

<llo_original>
// kernel: tpu_custom_call.1
$region0: #{tpu_custom_call.1}
  #allocation0 [shape = 'u32[]', space=smem, size = 0x4, offset = 0x4, fixed_abs, tag = 'smem constant byte address 0x4 - core index']
  #allocation1 [shape = 'u32[144,128]{1,0:T(1,128)}', space=vmem, size = 0x12000, scoped, tag = 'internal scratch']
  #allocation2 [shape = 'f32[1,1]{1,0:T(1,128)S(6)}', space=smem, size = 0x200, scoped, tag = 'scoped memory for tpu_custom_call.1']
  #allocation3 [shape = 'f32[1,1]{1,0:T(1,128)S(6)}', space=smem, size = 0x200, scoped, tag = 'scoped memory for tpu_custom_call.1']
  %s0 = inlined_call_operand.hbm [shape: f32[512,128], index: 0, kind: input, shape index: {}]
  %s1 = inlined_call_operand.vmem [shape: s32[1,512], index: 1, kind: input, shape index: {}]
  %s2 = inlined_call_operand.hbm [shape: f32[128,128], index: 2, kind: input, shape index: {}]
  %s3 = inlined_call_operand.vmem [shape: f32[1,128], index: 3, kind: input, shape index: {}]
  %s4 = inlined_call_operand.hbm [shape: f32[128,128], index: 4, kind: input, shape index: {}]
  %s5 = inlined_call_operand.vmem [shape: f32[1,128], index: 5, kind: input, shape index: {}]
  %s6 = inlined_call_operand.vmem [shape: f32[1,128], index: 6, kind: input, shape index: {}]
  %s7 = inlined_call_operand.vmem [shape: f32[1,128], index: 7, kind: input, shape index: {}]
  %s8 = inlined_call_operand.vmem [shape: f32[1,128], index: 8, kind: input, shape index: {}]
  %s9 = inlined_call_operand.hbm [shape: f32[128,256], index: 9, kind: input, shape index: {}]
  %s10 = inlined_call_operand.<no memory space> [shape: f32[1,1], index: 10, kind: input, shape index: {}]
  %s11 = inlined_call_operand.<no memory space> [shape: f32[1,1], index: 11, kind: input, shape index: {}]
  %s12 = inlined_call_operand.hbm [shape: f32[2,8,256], index: 12, kind: output, shape index: {}]
  %s13 = sld [smem:[#allocation0]]
  $region101: #{tpu_custom_call.1} parent=0
    _
  %s15 = ssub.s32 1, %s13
  %s16 = scalar_select 0, %s15, %s13
  %17 = sst [smem:[#allocation2]] %s10
  %18 = sst [smem:[#allocation3]] %s11
  $region1: #{tpu_custom_call.1} parent=0
    #allocation4 [shape = 'u8[131072]{0}', space=vmem, size = 0x20000, scoped, tag = 'input window, operand 0']
    #allocation5 [shape = 's32[2]{0}', space=sflag, size = 0x8, scoped, tag = 'scoped memory for tpu_custom_call.1']
    #allocation6 [shape = 's32[2]{0}', space=sflag, size = 0x8, scoped, tag = 'scoped memory for tpu_custom_call.1']
    #allocation7 [shape = 'u8[65536]{0}', space=vmem, size = 0x10000, scoped, tag = 'input window, operand 2, single buffered']
    #allocation8 [shape = 's32[1]{0}', space=sflag, size = 0x4, scoped, tag = 'scoped memory for tpu_custom_call.1']
    #allocation9 [shape = 'u8[65536]{0}', space=vmem, size = 0x10000, scoped, tag = 'input window, operand 4, single buffered']
    #allocation10 [shape = 'u8[131072]{0}', space=vmem, size = 0x20000, scoped, tag = 'input window, operand 9, single buffered']
    #allocation11 [shape = 's32[1]{0}', space=sflag, size = 0x4, scoped, tag = 'scoped memory for tpu_custom_call.1']
    #allocation12 [shape = 'u8[16384]{0}', space=vmem, size = 0x4000, scoped, tag = 'output window, operand 0']
    %19 = vsyncpa [#allocation5], 0
    %s20 = scalar_lea.sflag [#allocation5], 1
    %21 = vsyncpa %s20, 0
    %22 = vsyncpa [#allocation8], 0
    %23 = vsyncpa [#allocation11], 0
    %24 = vsyncpa [#allocation6], 0
    %s25 = scalar_lea.sflag [#allocation6], 1
    %26 = vsyncpa %s25, 0
    loop: start=0, step=1, limit=6
    $region2: #{tpu_custom_call.1} parent=1 // loop_pre_header
      _
    $region3: #{tpu_custom_call.1} parent=1 // loop_header
      %s28 = sphi 0, %s32
      %p29 = scmp.ge.s32.totalorder %s28, 6
      %s35 = sphi 0, %s47
      %s36 = sphi 0, %s43
      %s37 = sphi 0, %s35
      %s38 = sphi 0, %s36
      %s39 = sphi 0, %s37
      %s40 = sphi 0, %s38
      %s54 = sphi 0, %s56
      %s57 = sphi 0, %s54
      %s58 = sphi 0, %s57
      %s74 = sphi 0, %s58
      %s84 = sphi 0, %s86
      %s87 = sphi 0, %s84
      %s88 = sphi 0, %s87
      %s104 = sphi 0, %s88
      %s108 = sphi 0, %s108
      %s110 = sphi 0, %s108
      %s111 = sphi 0, %s110
      %s125 = sphi 0, %s111
      %s129 = sphi 0, %s129
      %s131 = sphi 0, %s129
      %s132 = sphi 0, %s131
      %s146 = sphi 0, %s132
      %s150 = sphi 0, %s150
      %s152 = sphi 0, %s150
      %s153 = sphi 0, %s152
      %s167 = sphi 0, %s153
      %s171 = sphi 0, %s171
      %s173 = sphi 0, %s171
      %s174 = sphi 0, %s173
      %s188 = sphi 0, %s174
      %s192 = sphi 0, %s192
      %s194 = sphi 0, %s192
      %s195 = sphi 0, %s194
      %s209 = sphi 0, %s195
      %s213 = sphi 0, %s213
      %s215 = sphi 0, %s213
      %s216 = sphi 0, %s215
      %s230 = sphi 0, %s216
      %s234 = sphi 0, %s234
      %s236 = sphi 0, %s234
      %s237 = sphi 0, %s236
      %s251 = sphi 0, %s237
      %s255 = sphi 0, %s255
      %s257 = sphi 0, %s255
      %s258 = sphi 0, %s257
      %s272 = sphi 0, %s258
      %s276 = sphi 0, %s276
      %s278 = sphi 0, %s276
      %s279 = sphi 0, %s278
      %s293 = sphi 0, %s279
      %s297 = sphi 0, %s297
      %s299 = sphi 0, %s297
      %s300 = sphi 0, %s299
      %s314 = sphi 0, %s300
      %s320 = sphi 0, %s322
      %s323 = sphi 0, %s320
      %s324 = sphi 0, %s323
      %s340 = sphi 0, %s324
    $region4: #{tpu_custom_call.1} parent=1 // loop_header_branch
      %31 = sbr.rel (%p29) target = $region8
    $region5: #{tpu_custom_call.1} parent=1 // loop_body
      %s33 = ssub.s32 %s28, 1
      %s34 = ssub.s32 %s28, 2
      %s41 = sadd.s32 1, %s36
      %p42 = scmp.ge.s32.totalorder %s41, 2
      %s43 = scalar_select %p42, 0, %s41
      %s44 = sadd.s32 1, %s35
      %s45 = scalar_select %p42, %s44, %s35
      %p46 = scmp.ge.s32.totalorder %s45, 2
      %s47 = scalar_select %p46, 0, %s45
      %s48 = smul.u32 %s35, 2
      %s49 = sadd.s32 %s48, %s36
      %s50 = smul.u32 %s47, 2
      %s51 = sadd.s32 %s50, %s43
      %s52 = ssub.s32 %s49, %s51
      %p53 = scmp.eq.s32.totalorder %s52, 0
      %s55 = sadd.s32 %s54, 1
      %s56 = scalar_select %p53, %s54, %s55
      %p59 = pneg %p53
      %p60 = scmp.eq.s32.totalorder %s28, 3
      %p61 = por %p59, %p60
      %p62 = scmp.ne.s32.totalorder %s54, %s57
      %p63 = scmp.eq.s32.totalorder %s28, 0
      %p64 = por %p62, %p63
      %p65 = scmp.ne.s32.totalorder %s54, %s57
      %p66 = scmp.eq.s32.totalorder %s33, 3
      %p67 = por %p65, %p66
      %p68 = scmp.ne.s32.totalorder %s57, %s58
      %p69 = scmp.eq.s32.totalorder %s33, 0
      %p70 = por %p68, %p69
      %p71 = scmp.ne.s32.totalorder %s57, %s58
      %p72 = scmp.eq.s32.totalorder %s34, 3
      %p73 = por %p71, %p72
      %p75 = scmp.ne.s32.totalorder %s58, %s74
      %p76 = scmp.eq.s32.totalorder %s34, 0
      %p77 = por %p75, %p76
      %s78 = smul.u32 %s35, 2
      %s79 = sadd.s32 %s78, %s36
      %s80 = smul.u32 %s47, 2
      %s81 = sadd.s32 %s80, %s43
      %s82 = ssub.s32 %s79, %s81
      %p83 = scmp.eq.s32.totalorder %s82, 0
      %s85 = sadd.s32 %s84, 1
      %s86 = scalar_select %p83, %s84, %s85
      %p89 = pneg %p83
      %p90 = scmp.eq.s32.totalorder %s28, 3
      %p91 = por %p89, %p90
      %p92 = scmp.ne.s32.totalorder %s84, %s87
      %p93 = scmp.eq.s32.totalorder %s28, 0
      %p94 = por %p92, %p93
      %p95 = scmp.ne.s32.totalorder %s84, %s87
      %p96 = scmp.eq.s32.totalorder %s33, 3
      %p97 = por %p95, %p96
      %p98 = scmp.ne.s32.totalorder %s87, %s88
      %p99 = scmp.eq.s32.totalorder %s33, 0
      %p100 = por %p98, %p99
      %p101 = scmp.ne.s32.totalorder %s87, %s88
      %p102 = scmp.eq.s32.totalorder %s34, 3
      %p103 = por %p101, %p102
      %p105 = scmp.ne.s32.totalorder %s88, %s104
      %p106 = scmp.eq.s32.totalorder %s34, 0
      %p107 = por %p105, %p106
      %s109 = sadd.s32 %s108, 1
      %p112 = scmp.eq.s32.totalorder %s28, 3
      %p113 = scmp.ne.s32.totalorder %s108, %s110
      %p114 = scmp.eq.s32.totalorder %s28, 0
      %p115 = por %p113, %p114
      %p116 = scmp.ne.s32.totalorder %s108, %s110
      %p117 = scmp.eq.s32.totalorder %s33, 3
      %p118 = por %p116, %p117
      %p119 = scmp.ne.s32.totalorder %s110, %s111
      %p120 = scmp.eq.s32.totalorder %s33, 0
      %p121 = por %p119, %p120
      %p122 = scmp.ne.s32.totalorder %s110, %s111
      %p123 = scmp.eq.s32.totalorder %s34, 3
      %p124 = por %p122, %p123
      %p126 = scmp.ne.s32.totalorder %s111, %s125
      %p127 = scmp.eq.s32.totalorder %s34, 0
      %p128 = por %p126, %p127
      %s130 = sadd.s32 %s129, 1
      %p133 = scmp.eq.s32.totalorder %s28, 3
      %p134 = scmp.ne.s32.totalorder %s129, %s131
      %p135 = scmp.eq.s32.totalorder %s28, 0
      %p136 = por %p134, %p135
      %p137 = scmp.ne.s32.totalorder %s129, %s131
      %p138 = scmp.eq.s32.totalorder %s33, 3
      %p139 = por %p137, %p138
      %p140 = scmp.ne.s32.totalorder %s131, %s132
      %p141 = scmp.eq.s32.totalorder %s33, 0
      %p142 = por %p140, %p141
      %p143 = scmp.ne.s32.totalorder %s131, %s132
      %p144 = scmp.eq.s32.totalorder %s34, 3
      %p145 = por %p143, %p144
      %p147 = scmp.ne.s32.totalorder %s132, %s146
      %p148 = scmp.eq.s32.totalorder %s34, 0
      %p149 = por %p147, %p148
      %s151 = sadd.s32 %s150, 1
      %p154 = scmp.eq.s32.totalorder %s28, 3
      %p155 = scmp.ne.s32.totalorder %s150, %s152
      %p156 = scmp.eq.s32.totalorder %s28, 0
      %p157 = por %p155, %p156
      %p158 = scmp.ne.s32.totalorder %s150, %s152
      %p159 = scmp.eq.s32.totalorder %s33, 3
      %p160 = por %p158, %p159
      %p161 = scmp.ne.s32.totalorder %s152, %s153
      %p162 = scmp.eq.s32.totalorder %s33, 0
      %p163 = por %p161, %p162
      %p164 = scmp.ne.s32.totalorder %s152, %s153
      %p165 = scmp.eq.s32.totalorder %s34, 3
      %p166 = por %p164, %p165
      %p168 = scmp.ne.s32.totalorder %s153, %s167
      %p169 = scmp.eq.s32.totalorder %s34, 0
      %p170 = por %p168, %p169
      %s172 = sadd.s32 %s171, 1
      %p175 = scmp.eq.s32.totalorder %s28, 3
      %p176 = scmp.ne.s32.totalorder %s171, %s173
      %p177 = scmp.eq.s32.totalorder %s28, 0
      %p178 = por %p176, %p177
      %p179 = scmp.ne.s32.totalorder %s171, %s173
      %p180 = scmp.eq.s32.totalorder %s33, 3
      %p181 = por %p179, %p180
      %p182 = scmp.ne.s32.totalorder %s173, %s174
      %p183 = scmp.eq.s32.totalorder %s33, 0
      %p184 = por %p182, %p183
      %p185 = scmp.ne.s32.totalorder %s173, %s174
      %p186 = scmp.eq.s32.totalorder %s34, 3
      %p187 = por %p185, %p186
      %p189 = scmp.ne.s32.totalorder %s174, %s188
      %p190 = scmp.eq.s32.totalorder %s34, 0
      %p191 = por %p189, %p190
      %s193 = sadd.s32 %s192, 1
      %p196 = scmp.eq.s32.totalorder %s28, 3
      %p197 = scmp.ne.s32.totalorder %s192, %s194
      %p198 = scmp.eq.s32.totalorder %s28, 0
      %p199 = por %p197, %p198
      %p200 = scmp.ne.s32.totalorder %s192, %s194
      %p201 = scmp.eq.s32.totalorder %s33, 3
      %p202 = por %p200, %p201
      %p203 = scmp.ne.s32.totalorder %s194, %s195
      %p204 = scmp.eq.s32.totalorder %s33, 0
      %p205 = por %p203, %p204
      %p206 = scmp.ne.s32.totalorder %s194, %s195
      %p207 = scmp.eq.s32.totalorder %s34, 3
      %p208 = por %p206, %p207
      %p210 = scmp.ne.s32.totalorder %s195, %s209
      %p211 = scmp.eq.s32.totalorder %s34, 0
      %p212 = por %p210, %p211
      %s214 = sadd.s32 %s213, 1
      %p217 = scmp.eq.s32.totalorder %s28, 3
      %p218 = scmp.ne.s32.totalorder %s213, %s215
      %p219 = scmp.eq.s32.totalorder %s28, 0
      %p220 = por %p218, %p219
      %p221 = scmp.ne.s32.totalorder %s213, %s215
      %p222 = scmp.eq.s32.totalorder %s33, 3
      %p223 = por %p221, %p222
      %p224 = scmp.ne.s32.totalorder %s215, %s216
      %p225 = scmp.eq.s32.totalorder %s33, 0
      %p226 = por %p224, %p225
      %p227 = scmp.ne.s32.totalorder %s215, %s216
      %p228 = scmp.eq.s32.totalorder %s34, 3
      %p229 = por %p227, %p228
      %p231 = scmp.ne.s32.totalorder %s216, %s230
      %p232 = scmp.eq.s32.totalorder %s34, 0
      %p233 = por %p231, %p232
      %s235 = sadd.s32 %s234, 1
      %p238 = scmp.eq.s32.totalorder %s28, 3
      %p239 = scmp.ne.s32.totalorder %s234, %s236
      %p240 = scmp.eq.s32.totalorder %s28, 0
      %p241 = por %p239, %p240
      %p242 = scmp.ne.s32.totalorder %s234, %s236
      %p243 = scmp.eq.s32.totalorder %s33, 3
      %p244 = por %p242, %p243
      %p245 = scmp.ne.s32.totalorder %s236, %s237
      %p246 = scmp.eq.s32.totalorder %s33, 0
      %p247 = por %p245, %p246
      %p248 = scmp.ne.s32.totalorder %s236, %s237
      %p249 = scmp.eq.s32.totalorder %s34, 3
      %p250 = por %p248, %p249
      %p252 = scmp.ne.s32.totalorder %s237, %s251
      %p253 = scmp.eq.s32.totalorder %s34, 0
      %p254 = por %p252, %p253
      %s256 = sadd.s32 %s255, 1
      %p259 = scmp.eq.s32.totalorder %s28, 3
      %p260 = scmp.ne.s32.totalorder %s255, %s257
      %p261 = scmp.eq.s32.totalorder %s28, 0
      %p262 = por %p260, %p261
      %p263 = scmp.ne.s32.totalorder %s255, %s257
      %p264 = scmp.eq.s32.totalorder %s33, 3
      %p265 = por %p263, %p264
      %p266 = scmp.ne.s32.totalorder %s257, %s258
      %p267 = scmp.eq.s32.totalorder %s33, 0
      %p268 = por %p266, %p267
      %p269 = scmp.ne.s32.totalorder %s257, %s258
      %p270 = scmp.eq.s32.totalorder %s34, 3
      %p271 = por %p269, %p270
      %p273 = scmp.ne.s32.totalorder %s258, %s272
      %p274 = scmp.eq.s32.totalorder %s34, 0
      %p275 = por %p273, %p274
      %s277 = sadd.s32 %s276, 1
      %p280 = scmp.eq.s32.totalorder %s28, 3
      %p281 = scmp.ne.s32.totalorder %s276, %s278
      %p282 = scmp.eq.s32.totalorder %s28, 0
      %p283 = por %p281, %p282
      %p284 = scmp.ne.s32.totalorder %s276, %s278
      %p285 = scmp.eq.s32.totalorder %s33, 3
      %p286 = por %p284, %p285
      %p287 = scmp.ne.s32.totalorder %s278, %s279
      %p288 = scmp.eq.s32.totalorder %s33, 0
      %p289 = por %p287, %p288
      %p290 = scmp.ne.s32.totalorder %s278, %s279
      %p291 = scmp.eq.s32.totalorder %s34, 3
      %p292 = por %p290, %p291
      %p294 = scmp.ne.s32.totalorder %s279, %s293
      %p295 = scmp.eq.s32.totalorder %s34, 0
      %p296 = por %p294, %p295
      %s298 = sadd.s32 %s297, 1
      %p301 = scmp.eq.s32.totalorder %s28, 3
      %p302 = scmp.ne.s32.totalorder %s297, %s299
      %p303 = scmp.eq.s32.totalorder %s28, 0
      %p304 = por %p302, %p303
      %p305 = scmp.ne.s32.totalorder %s297, %s299
      %p306 = scmp.eq.s32.totalorder %s33, 3
      %p307 = por %p305, %p306
      %p308 = scmp.ne.s32.totalorder %s299, %s300
      %p309 = scmp.eq.s32.totalorder %s33, 0
      %p310 = por %p308, %p309
      %p311 = scmp.ne.s32.totalorder %s299, %s300
      %p312 = scmp.eq.s32.totalorder %s34, 3
      %p313 = por %p311, %p312
      %p315 = scmp.ne.s32.totalorder %s300, %s314
      %p316 = scmp.eq.s32.totalorder %s34, 0
      %p317 = por %p315, %p316
      %s318 = ssub.s32 %s35, %s47
      %p319 = scmp.eq.s32.totalorder %s318, 0
      %s321 = sadd.s32 %s320, 1
      %s322 = scalar_select %p319, %s320, %s321
      %p325 = pneg %p319
      %p326 = scmp.eq.s32.totalorder %s28, 3
      %p327 = por %p325, %p326
      %p328 = scmp.ne.s32.totalorder %s320, %s323
      %p329 = scmp.eq.s32.totalorder %s28, 0
      %p330 = por %p328, %p329
      %p331 = scmp.ne.s32.totalorder %s320, %s323
      %p332 = scmp.eq.s32.totalorder %s33, 3
      %p333 = por %p331, %p332
      %p334 = scmp.ne.s32.totalorder %s323, %s324
      %p335 = scmp.eq.s32.totalorder %s33, 0
      %p336 = por %p334, %p335
      %p337 = scmp.ne.s32.totalorder %s323, %s324
      %p338 = scmp.eq.s32.totalorder %s34, 3
      %p339 = por %p337, %p338
      %p341 = scmp.ne.s32.totalorder %s324, %s340
      %p342 = scmp.eq.s32.totalorder %s34, 0
      %p343 = por %p341, %p342
      %p344 = scmp.le.s32.totalorder 1, %s28
      %p345 = scmp.lt.s32.totalorder %s28, 5
      %p346 = pnand %p344, %p345
      %p347 = pneg %p346
      // Predicated region
      $region9: #{tpu_custom_call.1} parent=5 // pred_check
        _
      $region10: #{tpu_custom_call.1} parent=5 // pred_check_branch
        %349 = sbr.rel (%p346) target = $region12
      $region11: #{tpu_custom_call.1} parent=5 // pred_region
        %s350 = ssub.s32 %s28, 1
        // Predicated region
        $region13: #{tpu_custom_call.1} parent=11 // pred_check
          %p351 = pneg %p121
        $region14: #{tpu_custom_call.1} parent=11 // pred_check_branch
          %353 = sbr.rel (%p351) target = $region16
        $region15: #{tpu_custom_call.1} parent=11 // pred_region
          %s355 = ssub.s32 2048, 2048
          %356 = vsyncadd [#allocation8], %s355
          %s357 = sshll.u32 [#allocation7], 4
          %s358 = int_to_ptr.vmem [resolvable:$true] %s357
          %363 = dma.hbm_to_vmem [thread:$0]  %s2, 2048, %s358, [#allocation8], 128, 128, 8
        $region16: #{tpu_custom_call.1} parent=11 // pred_fallthru
          _
        // Predicated region
        $region17: #{tpu_custom_call.1} parent=11 // pred_check
          %p364 = pneg %p142
        $region18: #{tpu_custom_call.1} parent=11 // pred_check_branch
          %366 = sbr.rel (%p364) target = $region20
        $region19: #{tpu_custom_call.1} parent=11 // pred_region
          _
        $region20: #{tpu_custom_call.1} parent=11 // pred_fallthru
          _
        // Predicated region
        $region21: #{tpu_custom_call.1} parent=11 // pred_check
          %p367 = pneg %p163
        $region22: #{tpu_custom_call.1} parent=11 // pred_check_branch
          %369 = sbr.rel (%p367) target = $region24
        $region23: #{tpu_custom_call.1} parent=11 // pred_region
          %s371 = ssub.s32 2048, 2048
          %372 = vsyncadd [#allocation8], %s371
          %s373 = sshll.u32 [#allocation9], 4
          %s374 = int_to_ptr.vmem [resolvable:$true] %s373
          %379 = dma.hbm_to_vmem [thread:$0]  %s4, 2048, %s374, [#allocation8], 128, 128, 8
        $region24: #{tpu_custom_call.1} parent=11 // pred_fallthru
          _
        // Predicated region
        $region25: #{tpu_custom_call.1} parent=11 // pred_check
          %p380 = pneg %p184
        $region26: #{tpu_custom_call.1} parent=11 // pred_check_branch
          %382 = sbr.rel (%p380) target = $region28
        $region27: #{tpu_custom_call.1} parent=11 // pred_region
          _
        $region28: #{tpu_custom_call.1} parent=11 // pred_fallthru
          _
        // Predicated region
        $region29: #{tpu_custom_call.1} parent=11 // pred_check
          %p383 = pneg %p205
        $region30: #{tpu_custom_call.1} parent=11 // pred_check_branch
          %385 = sbr.rel (%p383) target = $region32
        $region31: #{tpu_custom_call.1} parent=11 // pred_region
          _
        $region32: #{tpu_custom_call.1} parent=11 // pred_fallthru
          _
        // Predicated region
        $region33: #{tpu_custom_call.1} parent=11 // pred_check
          %p386 = pneg %p226
        $region34: #{tpu_custom_call.1} parent=11 // pred_check_branch
          %388 = sbr.rel (%p386) target = $region36
        $region35: #{tpu_custom_call.1} parent=11 // pred_region
          _
        $region36: #{tpu_custom_call.1} parent=11 // pred_fallthru
          _
        // Predicated region
        $region37: #{tpu_custom_call.1} parent=11 // pred_check
          %p389 = pneg %p247
        $region38: #{tpu_custom_call.1} parent=11 // pred_check_branch
          %391 = sbr.rel (%p389) target = $region40
        $region39: #{tpu_custom_call.1} parent=11 // pred_region
          _
        $region40: #{tpu_custom_call.1} parent=11 // pred_fallthru
          _
        // Predicated region
        $region41: #{tpu_custom_call.1} parent=11 // pred_check
          %p392 = pneg %p268
        $region42: #{tpu_custom_call.1} parent=11 // pred_check_branch
          %394 = sbr.rel (%p392) target = $region44
        $region43: #{tpu_custom_call.1} parent=11 // pred_region
          %s396 = ssub.s32 4096, 4096
          %397 = vsyncadd [#allocation11], %s396
          %s398 = sshll.u32 [#allocation10], 4
          %s399 = int_to_ptr.vmem [resolvable:$true] %s398
          %404 = dma.hbm_to_vmem [thread:$0]  %s9, 4096, %s399, [#allocation11], 256, 256, 16
        $region44: #{tpu_custom_call.1} parent=11 // pred_fallthru
          _
        // Predicated region
        $region45: #{tpu_custom_call.1} parent=11 // pred_check
          %p405 = pneg %p289
        $region46: #{tpu_custom_call.1} parent=11 // pred_check_branch
          %407 = sbr.rel (%p405) target = $region48
        $region47: #{tpu_custom_call.1} parent=11 // pred_region
          _
        $region48: #{tpu_custom_call.1} parent=11 // pred_fallthru
          _
        // Predicated region
        $region49: #{tpu_custom_call.1} parent=11 // pred_check
          %p408 = pneg %p310
        $region50: #{tpu_custom_call.1} parent=11 // pred_check_branch
          %410 = sbr.rel (%p408) target = $region52
        $region51: #{tpu_custom_call.1} parent=11 // pred_region
          _
        $region52: #{tpu_custom_call.1} parent=11 // pred_fallthru
          _
      $region12: #{tpu_custom_call.1} parent=5 // pred_fallthru
        _
      %p411 = scmp.lt.s32.totalorder %s28, 4
      // Predicated region
      $region53: #{tpu_custom_call.1} parent=5 // pred_check
        %p412 = pneg %p411
      $region54: #{tpu_custom_call.1} parent=5 // pred_check_branch
        %414 = sbr.rel (%p412) target = $region56
      $region55: #{tpu_custom_call.1} parent=5 // pred_region
        // Predicated region
        $region57: #{tpu_custom_call.1} parent=55 // pred_check
          %p415 = pneg %p64
        $region58: #{tpu_custom_call.1} parent=55 // pred_check_branch
          %417 = sbr.rel (%p415) target = $region60
        $region59: #{tpu_custom_call.1} parent=55 // pred_region
          %s418 = sand.u32 %s54, 1
          %s419 = scalar_lea.sflag [#allocation5], %s418
          %s420 = sand.u32 %s54, 1
          %s421 = smul.addr %s420, 128
          %s422 = scalar_lea.vmem [#allocation4], %s421
          %s423 = smul.u32 %s35, 2
          %s424 = sadd.s32 %s423, %s36
          %s425 = smul.u32 16, %s424
          %s427 = ssub.s32 2048, 2048
          %428 = vsyncadd %s419, %s427
          %s429 = smul.addr %s425, 128
          %s430 = scalar_lea.hbm %s0, %s429
          %s431 = sshll.u32 %s422, 4
          %s432 = int_to_ptr.vmem [resolvable:$true] %s431
          %437 = dma.hbm_to_vmem [thread:$0]  %s430, 2048, %s432, %s419, 128, 128, 8
        $region60: #{tpu_custom_call.1} parent=55 // pred_fallthru
          _
        // Predicated region
        $region61: #{tpu_custom_call.1} parent=55 // pred_check
          %p438 = pneg %p94
        $region62: #{tpu_custom_call.1} parent=55 // pred_check_branch
          %440 = sbr.rel (%p438) target = $region64
        $region63: #{tpu_custom_call.1} parent=55 // pred_region
          %s441 = smul.u32 %s35, 2
          %s442 = sadd.s32 %s441, %s36
          %p443 = scmp.lt.s32.totalorder %s442, 3
          %s444 = scalar_select %p443, %s442, 3
          %s445 = scalar_lea.vmem %s1, %s444
          %s446 = smul.u32 %s35, 2
          %s447 = sadd.s32 %s446, %s36
        $region64: #{tpu_custom_call.1} parent=55 // pred_fallthru
          _
      $region56: #{tpu_custom_call.1} parent=5 // pred_fallthru
        _
      %p448 = scmp.le.s32.totalorder 1, %s28
      %p449 = scmp.lt.s32.totalorder %s28, 5
      %p450 = pnand %p448, %p449
      %p451 = pneg %p450
      // Predicated region
      $region65: #{tpu_custom_call.1} parent=5 // pred_check
        _
      $region66: #{tpu_custom_call.1} parent=5 // pred_check_branch
        %453 = sbr.rel (%p450) target = $region68
      $region67: #{tpu_custom_call.1} parent=5 // pred_region
        %s454 = ssub.s32 %s28, 1
        %s455 = sand.u32 %s57, 1
        %s456 = scalar_lea.sflag [#allocation5], %s455
        %s457 = sand.u32 %s57, 1
        %s458 = smul.addr %s457, 128
        %s459 = scalar_lea.vmem [#allocation4], %s458
        // Predicated region
        $region69: #{tpu_custom_call.1} parent=67 // pred_check
          %p460 = pneg %p70
        $region70: #{tpu_custom_call.1} parent=67 // pred_check_branch
          %462 = sbr.rel (%p460) target = $region72
        $region71: #{tpu_custom_call.1} parent=67 // pred_region
          %463 = dma.done %s456, 2048
        $region72: #{tpu_custom_call.1} parent=67 // pred_fallthru
          _
        // Predicated region
        $region73: #{tpu_custom_call.1} parent=67 // pred_check
          %p464 = pneg %p121
        $region74: #{tpu_custom_call.1} parent=67 // pred_check_branch
          %466 = sbr.rel (%p464) target = $region76
        $region75: #{tpu_custom_call.1} parent=67 // pred_region
          %467 = dma.done [#allocation8], 2048
        $region76: #{tpu_custom_call.1} parent=67 // pred_fallthru
          _
        // Predicated region
        $region77: #{tpu_custom_call.1} parent=67 // pred_check
          %p468 = pneg %p163
        $region78: #{tpu_custom_call.1} parent=67 // pred_check_branch
          %470 = sbr.rel (%p468) target = $region80
        $region79: #{tpu_custom_call.1} parent=67 // pred_region
          %471 = dma.done [#allocation8], 2048
        $region80: #{tpu_custom_call.1} parent=67 // pred_fallthru
          _
        // Predicated region
        $region81: #{tpu_custom_call.1} parent=67 // pred_check
          %p472 = pneg %p268
        $region82: #{tpu_custom_call.1} parent=67 // pred_check_branch
          %474 = sbr.rel (%p472) target = $region84
        $region83: #{tpu_custom_call.1} parent=67 // pred_region
          %475 = dma.done [#allocation11], 4096
        $region84: #{tpu_custom_call.1} parent=67 // pred_fallthru
          _
        %s476 = sand.u32 %s57, 1
        %s477 = scalar_lea.sflag [#allocation5], %s476
        %s478 = sand.u32 %s57, 1
        %s479 = smul.addr %s478, 128
        %s480 = scalar_lea.vmem [#allocation4], %s479
        %p481 = pneg %p70
        %p482 = pneg %p67
        %s483 = smul.u32 %s37, 2
        %s484 = sadd.s32 %s483, %s38
        %p485 = scmp.lt.s32.totalorder %s484, 3
        %s486 = scalar_select %p485, %s484, 3
        %s487 = scalar_lea.vmem %s1, %s486
        %p488 = pneg %p100
        %p489 = pneg %p97
        %p490 = pneg %p121
        %p491 = pneg %p118
        %p492 = pneg %p142
        %p493 = pneg %p139
        %p494 = pneg %p163
        %p495 = pneg %p160
        %p496 = pneg %p184
        %p497 = pneg %p181
        %p498 = pneg %p205
        %p499 = pneg %p202
        %p500 = pneg %p226
        %p501 = pneg %p223
        %p502 = pneg %p247
        %p503 = pneg %p244
        %p504 = pneg %p268
        %p505 = pneg %p265
        %p506 = pneg %p289
        %p507 = pneg %p286
        %p508 = pneg %p310
        %p509 = pneg %p307
        %p510 = pneg %p336
        %p511 = pneg %p333
        %s512 = sand.u32 %s323, 1
        %s513 = scalar_lea.sflag [#allocation6], %s512
        %s514 = sand.u32 %s323, 1
        %s515 = smul.addr %s514, 16
        %s516 = scalar_lea.vmem [#allocation12], %s515
        %s517 = smul.u32 %s37, 2
        %s518 = sadd.s32 %s517, %s38
        %s519 = smul.u32 16, %s518
        %s520 = smul.u32 %s37, 2
        %s521 = sadd.s32 %s520, %s38
        %p522 = scmp.lt.s32.totalorder %s521, 3
        %s523 = scalar_select %p522, %s521, 3
        %s524 = scalar_lea.vmem %s1, %s523
        %s525 = smul.u32 %s37, 2
        %s526 = sadd.s32 %s525, %s38
        %p527 = scmp.eq.s32.totalorder %s38, 0
        // Predicated region
        $region85: #{tpu_custom_call.1} parent=67 // pred_check
          %p528 = pneg %p527
        $region86: #{tpu_custom_call.1} parent=67 // pred_check_branch
          %530 = sbr.rel (%p528) target = $region88
        $region87: #{tpu_custom_call.1} parent=67 // pred_region
          %531 = vst [vmem:[%s516] sm:$0xff] 0.0
          %532 = vst [vmem:[%s516 + $0x8] sm:$0xff] 0.0
        $region88: #{tpu_custom_call.1} parent=67 // pred_fallthru
          _
        %s533 = sld [smem:[#allocation2]]
        %s534 = sld [smem:[#allocation3]]
        %v535 = vld [vmem:[%s459] sm:$0xff]
        %v536 = vld [vmem:[%s459 + $0x8] sm:$0xff]
        %v537 = vld [vmem:[%s459 + $0x10] sm:$0xff]
        %v538 = vld [vmem:[%s459 + $0x18] sm:$0xff]
        %v539 = vld [vmem:[%s459 + $0x20] sm:$0xff]
        %v540 = vld [vmem:[%s459 + $0x28] sm:$0xff]
        %v541 = vld [vmem:[%s459 + $0x30] sm:$0xff]
        %v542 = vld [vmem:[%s459 + $0x38] sm:$0xff]
        %v543 = vld [vmem:[%s459 + $0x40] sm:$0xff]
        %v544 = vld [vmem:[%s459 + $0x48] sm:$0xff]
        %v545 = vld [vmem:[%s459 + $0x50] sm:$0xff]
        %v546 = vld [vmem:[%s459 + $0x58] sm:$0xff]
        %v547 = vld [vmem:[%s459 + $0x60] sm:$0xff]
        %v548 = vld [vmem:[%s459 + $0x68] sm:$0xff]
        %v549 = vld [vmem:[%s459 + $0x70] sm:$0xff]
        %v550 = vld [vmem:[%s459 + $0x78] sm:$0xff]
        %v551 = vld [vmem:[#allocation7] sm:$0xff]
        %v552 = vld [vmem:[#allocation7 + $0x8] sm:$0xff]
        %v553 = vld [vmem:[#allocation7 + $0x10] sm:$0xff]
        %v554 = vld [vmem:[#allocation7 + $0x18] sm:$0xff]
        %v555 = vld [vmem:[#allocation7 + $0x20] sm:$0xff]
        %v556 = vld [vmem:[#allocation7 + $0x28] sm:$0xff]
        %v557 = vld [vmem:[#allocation7 + $0x30] sm:$0xff]
        %v558 = vld [vmem:[#allocation7 + $0x38] sm:$0xff]
        %v559 = vld [vmem:[#allocation7 + $0x40] sm:$0xff]
        %v560 = vld [vmem:[#allocation7 + $0x48] sm:$0xff]
        %v561 = vld [vmem:[#allocation7 + $0x50] sm:$0xff]
        %v562 = vld [vmem:[#allocation7 + $0x58] sm:$0xff]
        %v563 = vld [vmem:[#allocation7 + $0x60] sm:$0xff]
        %v564 = vld [vmem:[#allocation7 + $0x68] sm:$0xff]
        %v565 = vld [vmem:[#allocation7 + $0x70] sm:$0xff]
        %v566 = vld [vmem:[#allocation7 + $0x78] sm:$0xff]
        %v567 = vld [vmem:[%s3] sm:$0x1]
        %v569 = vlaneseq
        %v570 = vshrl.u32 %v569, 7
        %v571 = vsub.s32 0, %v570
        %v572 = vrot.slane %v567, %v571
        %574 = vmatprep.subr.mxu0 0.0
        %575 = vmatpush1.msra.mxu0 %v551
        %576 = vmatprep.subr.mxu0 0.0
        %577 = vmatpush1.msra.mxu0 %v552
        %578 = vmatprep.subr.mxu0 0.0
        %579 = vmatpush1.msra.mxu0 %v553
        %580 = vmatprep.subr.mxu0 0.0
        %581 = vmatpush1.msra.mxu0 %v554
        %582 = vmatprep.subr.mxu0 0.0
        %583 = vmatpush1.msra.mxu0 %v555
        %584 = vmatprep.subr.mxu0 0.0
        %585 = vmatpush1.msra.mxu0 %v556
        %586 = vmatprep.subr.mxu0 0.0
        %587 = vmatpush1.msra.mxu0 %v557
        %588 = vmatprep.subr.mxu0 0.0
        %589 = vmatpush1.msra.mxu0 %v558
        %590 = vmatprep.subr.mxu0 0.0
        %591 = vmatpush1.msra.mxu0 %v559
        %592 = vmatprep.subr.mxu0 0.0
        %593 = vmatpush1.msra.mxu0 %v560
        %594 = vmatprep.subr.mxu0 0.0
        %595 = vmatpush1.msra.mxu0 %v561
        %596 = vmatprep.subr.mxu0 0.0
        %597 = vmatpush1.msra.mxu0 %v562
        %598 = vmatprep.subr.mxu0 0.0
        %599 = vmatpush1.msra.mxu0 %v563
        %600 = vmatprep.subr.mxu0 0.0
        %601 = vmatpush1.msra.mxu0 %v564
        %602 = vmatprep.subr.mxu0 0.0
        %603 = vmatpush1.msra.mxu0 %v565
        %604 = vmatprep.subr.mxu0 0.0
        %605 = vmatpush1.msra.mxu0 %v566
        %606 = vmatprep.subr.mxu0 0.0
        %607 = vmatpush1.msra.mxu0 0.0
        %608 = vmatprep.subr.mxu0 0.0
        %609 = vmatpush1.msra.mxu0 0.0
        %610 = vmatprep.subr.mxu0 0.0
        %611 = vmatpush1.msra.mxu0 0.0
        %612 = vmatprep.subr.mxu0 0.0
        %613 = vmatpush1.msra.mxu0 0.0
        %614 = vmatprep.subr.mxu0 0.0
        %615 = vmatpush1.msra.mxu0 0.0
        %616 = vmatprep.subr.mxu0 0.0
        %617 = vmatpush1.msra.mxu0 0.0
        %618 = vmatprep.subr.mxu0 0.0
        %619 = vmatpush1.msra.mxu0 0.0
        %620 = vmatprep.subr.mxu0 0.0
        %621 = vmatpush1.msra.mxu0 0.0
        %622 = vmatprep.subr.mxu0 0.0
        %623 = vmatpush1.msra.mxu0 0.0
        %624 = vmatprep.subr.mxu0 0.0
        %625 = vmatpush1.msra.mxu0 0.0
        %626 = vmatprep.subr.mxu0 0.0
        %627 = vmatpush1.msra.mxu0 0.0
        %628 = vmatprep.subr.mxu0 0.0
        %629 = vmatpush1.msra.mxu0 0.0
        %630 = vmatprep.subr.mxu0 0.0
        %631 = vmatpush1.msra.mxu0 0.0
        %632 = vmatprep.subr.mxu0 0.0
        %633 = vmatpush1.msra.mxu0 0.0
        %634 = vmatprep.subr.mxu0 0.0
        %635 = vmatpush1.msra.mxu0 0.0
        %636 = vmatprep.subr.mxu0 0.0
        %637 = vmatpush1.msra.mxu0 0.0
        %638 = vmatprep.mubr.f32.mxu0 0.0
        %639 = vmatmul.mubr.f32.gmra.mrb[0].mxu0 %v535
        %v640 = vpop.f32.mrb[0].mxu0
        %v641 = vadd.f32 %v572, %v640
        %v642 = vpop.f32.mrb[0].mxu0
        %643 = vmatprep.mubr.f32.mxu0 0.0
        %644 = vmatmul.mubr.f32.gmra.mrb[0].mxu0 %v536
        %v645 = vpop.f32.mrb[0].mxu0
        %v646 = vadd.f32 %v572, %v645
        %v647 = vpop.f32.mrb[0].mxu0
        %648 = vmatprep.mubr.f32.mxu0 0.0
        %649 = vmatmul.mubr.f32.gmra.mrb[0].mxu0 %v537
        %v650 = vpop.f32.mrb[0].mxu0
        %v651 = vadd.f32 %v572, %v650
        %v652 = vpop.f32.mrb[0].mxu0
        %653 = vmatprep.mubr.f32.mxu0 0.0
        %654 = vmatmul.mubr.f32.gmra.mrb[0].mxu0 %v538
        %v655 = vpop.f32.mrb[0].mxu0
        %v656 = vadd.f32 %v572, %v655
        %v657 = vpop.f32.mrb[0].mxu0
        %658 = vmatprep.mubr.f32.mxu0 0.0
        %659 = vmatmul.mubr.f32.gmra.mrb[0].mxu0 %v539
        %v660 = vpop.f32.mrb[0].mxu0
        %v661 = vadd.f32 %v572, %v660
        %v662 = vpop.f32.mrb[0].mxu0
        %663 = vmatprep.mubr.f32.mxu0 0.0
        %664 = vmatmul.mubr.f32.gmra.mrb[0].mxu0 %v540
        %v665 = vpop.f32.mrb[0].mxu0
        %v666 = vadd.f32 %v572, %v665
        %v667 = vpop.f32.mrb[0].mxu0
        %668 = vmatprep.mubr.f32.mxu0 0.0
        %669 = vmatmul.mubr.f32.gmra.mrb[0].mxu0 %v541
        %v670 = vpop.f32.mrb[0].mxu0
        %v671 = vadd.f32 %v572, %v670
        %v672 = vpop.f32.mrb[0].mxu0
        %673 = vmatprep.mubr.f32.mxu0 0.0
        %674 = vmatmul.mubr.f32.gmra.mrb[0].mxu0 %v542
        %v675 = vpop.f32.mrb[0].mxu0
        %v676 = vadd.f32 %v572, %v675
        %v677 = vpop.f32.mrb[0].mxu0
        %678 = vmatprep.mubr.f32.mxu0 0.0
        %679 = vmatmul.mubr.f32.gmra.mrb[0].mxu0 %v543
        %v680 = vpop.f32.mrb[0].mxu0
        %v681 = vadd.f32 %v572, %v680
        %v682 = vpop.f32.mrb[0].mxu0
        %683 = vmatprep.mubr.f32.mxu0 0.0
        %684 = vmatmul.mubr.f32.gmra.mrb[0].mxu0 %v544
        %v685 = vpop.f32.mrb[0].mxu0
        %v686 = vadd.f32 %v572, %v685
        %v687 = vpop.f32.mrb[0].mxu0
        %688 = vmatprep.mubr.f32.mxu0 0.0
        %689 = vmatmul.mubr.f32.gmra.mrb[0].mxu0 %v545
        %v690 = vpop.f32.mrb[0].mxu0
        %v691 = vadd.f32 %v572, %v690
        %v692 = vpop.f32.mrb[0].mxu0
        %693 = vmatprep.mubr.f32.mxu0 0.0
        %694 = vmatmul.mubr.f32.gmra.mrb[0].mxu0 %v546
        %v695 = vpop.f32.mrb[0].mxu0
        %v696 = vadd.f32 %v572, %v695
        %v697 = vpop.f32.mrb[0].mxu0
        %698 = vmatprep.mubr.f32.mxu0 0.0
        %699 = vmatmul.mubr.f32.gmra.mrb[0].mxu0 %v547
        %v700 = vpop.f32.mrb[0].mxu0
        %v701 = vadd.f32 %v572, %v700
        %v702 = vpop.f32.mrb[0].mxu0
        %703 = vmatprep.mubr.f32.mxu0 0.0
        %704 = vmatmul.mubr.f32.gmra.mrb[0].mxu0 %v548
        %v705 = vpop.f32.mrb[0].mxu0
        %v706 = vadd.f32 %v572, %v705
        %v707 = vpop.f32.mrb[0].mxu0
        %708 = vmatprep.mubr.f32.mxu0 0.0
        %709 = vmatmul.mubr.f32.gmra.mrb[0].mxu0 %v549
        %v710 = vpop.f32.mrb[0].mxu0
        %v711 = vadd.f32 %v572, %v710
        %v712 = vpop.f32.mrb[0].mxu0
        %713 = vmatprep.mubr.f32.mxu0 0.0
        %714 = vmatmul.mubr.f32.gmra.mrb[0].mxu0 %v550
        %v715 = vpop.f32.mrb[0].mxu0
        %v716 = vadd.f32 %v572, %v715
        %v717 = vpop.f32.mrb[0].mxu0
        %718 = vdwg.mxu0
        %vm719 = vcmp.ge.f32.partialorder %v641, 0.0
        %vm720 = vcmp.ge.f32.partialorder %v646, 0.0
        %vm721 = vcmp.ge.f32.partialorder %v651, 0.0
        %vm722 = vcmp.ge.f32.partialorder %v656, 0.0
        %vm723 = vcmp.ge.f32.partialorder %v661, 0.0
        %vm724 = vcmp.ge.f32.partialorder %v666, 0.0
        %vm725 = vcmp.ge.f32.partialorder %v671, 0.0
        %vm726 = vcmp.ge.f32.partialorder %v676, 0.0
        %vm727 = vcmp.ge.f32.partialorder %v681, 0.0
        %vm728 = vcmp.ge.f32.partialorder %v686, 0.0
        %vm729 = vcmp.ge.f32.partialorder %v691, 0.0
        %vm730 = vcmp.ge.f32.partialorder %v696, 0.0
        %vm731 = vcmp.ge.f32.partialorder %v701, 0.0
        %vm732 = vcmp.ge.f32.partialorder %v706, 0.0
        %vm733 = vcmp.ge.f32.partialorder %v711, 0.0
        %vm734 = vcmp.ge.f32.partialorder %v716, 0.0
        %v735 = vstv %s533
        %v736 = vmul.f32 %v735, %v641
        %v737 = vmul.f32 %v735, %v646
        %v738 = vmul.f32 %v735, %v651
        %v739 = vmul.f32 %v735, %v656
        %v740 = vmul.f32 %v735, %v661
        %v741 = vmul.f32 %v735, %v666
        %v742 = vmul.f32 %v735, %v671
        %v743 = vmul.f32 %v735, %v676
        %v744 = vmul.f32 %v735, %v681
        %v745 = vmul.f32 %v735, %v686
        %v746 = vmul.f32 %v735, %v691
        %v747 = vmul.f32 %v735, %v696
        %v748 = vmul.f32 %v735, %v701
        %v749 = vmul.f32 %v735, %v706
        %v750 = vmul.f32 %v735, %v711
        %v751 = vmul.f32 %v735, %v716
        %v752 = vsel %vm719, %v641, %v736
        %v753 = vsel %vm720, %v646, %v737
        %v754 = vsel %vm721, %v651, %v738
        %v755 = vsel %vm722, %v656, %v739
        %v756 = vsel %vm723, %v661, %v740
        %v757 = vsel %vm724, %v666, %v741
        %v758 = vsel %vm725, %v671, %v742
        %v759 = vsel %vm726, %v676, %v743
        %v760 = vsel %vm727, %v681, %v744
        %v761 = vsel %vm728, %v686, %v745
        %v762 = vsel %vm729, %v691, %v746
        %v763 = vsel %vm730, %v696, %v747
        %v764 = vsel %vm731, %v701, %v748
        %v765 = vsel %vm732, %v706, %v749
        %v766 = vsel %vm733, %v711, %v750
        %v767 = vsel %vm734, %v716, %v751
        %v768 = vld [vmem:[#allocation9] sm:$0xff]
        %v769 = vld [vmem:[#allocation9 + $0x8] sm:$0xff]
        %v770 = vld [vmem:[#allocation9 + $0x10] sm:$0xff]
        %v771 = vld [vmem:[#allocation9 + $0x18] sm:$0xff]
        %v772 = vld [vmem:[#allocation9 + $0x20] sm:$0xff]
        %v773 = vld [vmem:[#allocation9 + $0x28] sm:$0xff]
        %v774 = vld [vmem:[#allocation9 + $0x30] sm:$0xff]
        %v775 = vld [vmem:[#allocation9 + $0x38] sm:$0xff]
        %v776 = vld [vmem:[#allocation9 + $0x40] sm:$0xff]
        %v777 = vld [vmem:[#allocation9 + $0x48] sm:$0xff]
        %v778 = vld [vmem:[#allocation9 + $0x50] sm:$0xff]
        %v779 = vld [vmem:[#allocation9 + $0x58] sm:$0xff]
        %v780 = vld [vmem:[#allocation9 + $0x60] sm:$0xff]
        %v781 = vld [vmem:[#allocation9 + $0x68] sm:$0xff]
        %v782 = vld [vmem:[#allocation9 + $0x70] sm:$0xff]
        %v783 = vld [vmem:[#allocation9 + $0x78] sm:$0xff]
        %v784 = vld [vmem:[%s5] sm:$0x1]
        %v786 = vlaneseq
        %v787 = vshrl.u32 %v786, 7
        %v788 = vsub.s32 0, %v787
        %v789 = vrot.slane %v784, %v788
        %791 = vmatprep.subr.mxu0 0.0
        %792 = vmatpush1.msra.mxu0 %v768
        %793 = vmatprep.subr.mxu0 0.0
        %794 = vmatpush1.msra.mxu0 %v769
        %795 = vmatprep.subr.mxu0 0.0
        %796 = vmatpush1.msra.mxu0 %v770
        %797 = vmatprep.subr.mxu0 0.0
        %798 = vmatpush1.msra.mxu0 %v771
        %799 = vmatprep.subr.mxu0 0.0
        %800 = vmatpush1.msra.mxu0 %v772
        %801 = vmatprep.subr.mxu0 0.0
        %802 = vmatpush1.msra.mxu0 %v773
        %803 = vmatprep.subr.mxu0 0.0
        %804 = vmatpush1.msra.mxu0 %v774
        %805 = vmatprep.subr.mxu0 0.0
        %806 = vmatpush1.msra.mxu0 %v775
        %807 = vmatprep.subr.mxu0 0.0
        %808 = vmatpush1.msra.mxu0 %v776
        %809 = vmatprep.subr.mxu0 0.0
        %810 = vmatpush1.msra.mxu0 %v777
        %811 = vmatprep.subr.mxu0 0.0
        %812 = vmatpush1.msra.mxu0 %v778
        %813 = vmatprep.subr.mxu0 0.0
        %814 = vmatpush1.msra.mxu0 %v779
        %815 = vmatprep.subr.mxu0 0.0
        %816 = vmatpush1.msra.mxu0 %v780
        %817 = vmatprep.subr.mxu0 0.0
        %818 = vmatpush1.msra.mxu0 %v781
        %819 = vmatprep.subr.mxu0 0.0
        %820 = vmatpush1.msra.mxu0 %v782
        %821 = vmatprep.subr.mxu0 0.0
        %822 = vmatpush1.msra.mxu0 %v783
        %823 = vmatprep.subr.mxu0 0.0
        %824 = vmatpush1.msra.mxu0 0.0
        %825 = vmatprep.subr.mxu0 0.0
        %826 = vmatpush1.msra.mxu0 0.0
        %827 = vmatprep.subr.mxu0 0.0
        %828 = vmatpush1.msra.mxu0 0.0
        %829 = vmatprep.subr.mxu0 0.0
        %830 = vmatpush1.msra.mxu0 0.0
        %831 = vmatprep.subr.mxu0 0.0
        %832 = vmatpush1.msra.mxu0 0.0
        %833 = vmatprep.subr.mxu0 0.0
        %834 = vmatpush1.msra.mxu0 0.0
        %835 = vmatprep.subr.mxu0 0.0
        %836 = vmatpush1.msra.mxu0 0.0
        %837 = vmatprep.subr.mxu0 0.0
        %838 = vmatpush1.msra.mxu0 0.0
        %839 = vmatprep.subr.mxu0 0.0
        %840 = vmatpush1.msra.mxu0 0.0
        %841 = vmatprep.subr.mxu0 0.0
        %842 = vmatpush1.msra.mxu0 0.0
        %843 = vmatprep.subr.mxu0 0.0
        %844 = vmatpush1.msra.mxu0 0.0
        %845 = vmatprep.subr.mxu0 0.0
        %846 = vmatpush1.msra.mxu0 0.0
        %847 = vmatprep.subr.mxu0 0.0
        %848 = vmatpush1.msra.mxu0 0.0
        %849 = vmatprep.subr.mxu0 0.0
        %850 = vmatpush1.msra.mxu0 0.0
        %851 = vmatprep.subr.mxu0 0.0
        %852 = vmatpush1.msra.mxu0 0.0
        %853 = vmatprep.subr.mxu0 0.0
        %854 = vmatpush1.msra.mxu0 0.0
        %855 = vmatprep.mubr.f32.mxu0 0.0
        %856 = vmatmul.mubr.f32.gmra.mrb[0].mxu0 %v752
        %v857 = vpop.f32.mrb[0].mxu0
        %v858 = vadd.f32 %v789, %v857
        %v859 = vpop.f32.mrb[0].mxu0
        %860 = vmatprep.mubr.f32.mxu0 0.0
        %861 = vmatmul.mubr.f32.gmra.mrb[0].mxu0 %v753
        %v862 = vpop.f32.mrb[0].mxu0
        %v863 = vadd.f32 %v789, %v862
        %v864 = vpop.f32.mrb[0].mxu0
        %865 = vmatprep.mubr.f32.mxu0 0.0
        %866 = vmatmul.mubr.f32.gmra.mrb[0].mxu0 %v754
        %v867 = vpop.f32.mrb[0].mxu0
        %v868 = vadd.f32 %v789, %v867
        %v869 = vpop.f32.mrb[0].mxu0
        %870 = vmatprep.mubr.f32.mxu0 0.0
        %871 = vmatmul.mubr.f32.gmra.mrb[0].mxu0 %v755
        %v872 = vpop.f32.mrb[0].mxu0
        %v873 = vadd.f32 %v789, %v872
        %v874 = vpop.f32.mrb[0].mxu0
        %875 = vmatprep.mubr.f32.mxu0 0.0
        %876 = vmatmul.mubr.f32.gmra.mrb[0].mxu0 %v756
        %v877 = vpop.f32.mrb[0].mxu0
        %v878 = vadd.f32 %v789, %v877
        %v879 = vpop.f32.mrb[0].mxu0
        %880 = vmatprep.mubr.f32.mxu0 0.0
        %881 = vmatmul.mubr.f32.gmra.mrb[0].mxu0 %v757
        %v882 = vpop.f32.mrb[0].mxu0
        %v883 = vadd.f32 %v789, %v882
        %v884 = vpop.f32.mrb[0].mxu0
        %885 = vmatprep.mubr.f32.mxu0 0.0
        %886 = vmatmul.mubr.f32.gmra.mrb[0].mxu0 %v758
        %v887 = vpop.f32.mrb[0].mxu0
        %v888 = vadd.f32 %v789, %v887
        %v889 = vpop.f32.mrb[0].mxu0
        %890 = vmatprep.mubr.f32.mxu0 0.0
        %891 = vmatmul.mubr.f32.gmra.mrb[0].mxu0 %v759
        %v892 = vpop.f32.mrb[0].mxu0
        %v893 = vadd.f32 %v789, %v892
        %v894 = vpop.f32.mrb[0].mxu0
        %895 = vmatprep.mubr.f32.mxu0 0.0
        %896 = vmatmul.mubr.f32.gmra.mrb[0].mxu0 %v760
        %v897 = vpop.f32.mrb[0].mxu0
        %v898 = vadd.f32 %v789, %v897
        %v899 = vpop.f32.mrb[0].mxu0
        %900 = vmatprep.mubr.f32.mxu0 0.0
        %901 = vmatmul.mubr.f32.gmra.mrb[0].mxu0 %v761
        %v902 = vpop.f32.mrb[0].mxu0
        %v903 = vadd.f32 %v789, %v902
        %v904 = vpop.f32.mrb[0].mxu0
        %905 = vmatprep.mubr.f32.mxu0 0.0
        %906 = vmatmul.mubr.f32.gmra.mrb[0].mxu0 %v762
        %v907 = vpop.f32.mrb[0].mxu0
        %v908 = vadd.f32 %v789, %v907
        %v909 = vpop.f32.mrb[0].mxu0
        %910 = vmatprep.mubr.f32.mxu0 0.0
        %911 = vmatmul.mubr.f32.gmra.mrb[0].mxu0 %v763
        %v912 = vpop.f32.mrb[0].mxu0
        %v913 = vadd.f32 %v789, %v912
        %v914 = vpop.f32.mrb[0].mxu0
        %915 = vmatprep.mubr.f32.mxu0 0.0
        %916 = vmatmul.mubr.f32.gmra.mrb[0].mxu0 %v764
        %v917 = vpop.f32.mrb[0].mxu0
        %v918 = vadd.f32 %v789, %v917
        %v919 = vpop.f32.mrb[0].mxu0
        %920 = vmatprep.mubr.f32.mxu0 0.0
        %921 = vmatmul.mubr.f32.gmra.mrb[0].mxu0 %v765
        %v922 = vpop.f32.mrb[0].mxu0
        %v923 = vadd.f32 %v789, %v922
        %v924 = vpop.f32.mrb[0].mxu0
        %925 = vmatprep.mubr.f32.mxu0 0.0
        %926 = vmatmul.mubr.f32.gmra.mrb[0].mxu0 %v766
        %v927 = vpop.f32.mrb[0].mxu0
        %v928 = vadd.f32 %v789, %v927
        %v929 = vpop.f32.mrb[0].mxu0
        %930 = vmatprep.mubr.f32.mxu0 0.0
        %931 = vmatmul.mubr.f32.gmra.mrb[0].mxu0 %v767
        %v932 = vpop.f32.mrb[0].mxu0
        %v933 = vadd.f32 %v789, %v932
        %v934 = vpop.f32.mrb[0].mxu0
        %935 = vdwg.mxu0
        %v936 = vld [vmem:[%s8] sm:$0x1]
        %937 = vadd.xlane.f32.xlu0 %v858
        %v938 = vpop.xlane.xlu0 %937
        %939 = vadd.xlane.f32.xlu0 %v863
        %v940 = vpop.xlane.xlu0 %939
        %941 = vadd.xlane.f32.xlu0 %v868
        %v942 = vpop.xlane.xlu0 %941
        %943 = vadd.xlane.f32.xlu0 %v873
        %v944 = vpop.xlane.xlu0 %943
        %945 = vadd.xlane.f32.xlu0 %v878
        %v946 = vpop.xlane.xlu0 %945
        %947 = vadd.xlane.f32.xlu0 %v883
        %v948 = vpop.xlane.xlu0 %947
        %949 = vadd.xlane.f32.xlu0 %v888
        %v950 = vpop.xlane.xlu0 %949
        %951 = vadd.xlane.f32.xlu0 %v893
        %v952 = vpop.xlane.xlu0 %951
        %953 = vadd.xlane.f32.xlu0 %v898
        %v954 = vpop.xlane.xlu0 %953
        %955 = vadd.xlane.f32.xlu0 %v903
        %v956 = vpop.xlane.xlu0 %955
        %957 = vadd.xlane.f32.xlu0 %v908
        %v958 = vpop.xlane.xlu0 %957
        %959 = vadd.xlane.f32.xlu0 %v913
        %v960 = vpop.xlane.xlu0 %959
        %961 = vadd.xlane.f32.xlu0 %v918
        %v962 = vpop.xlane.xlu0 %961
        %963 = vadd.xlane.f32.xlu0 %v923
        %v964 = vpop.xlane.xlu0 %963
        %965 = vadd.xlane.f32.xlu0 %v928
        %v966 = vpop.xlane.xlu0 %965
        %967 = vadd.xlane.f32.xlu0 %v933
        %v968 = vpop.xlane.xlu0 %967
        %v969 = vmul.f32 %v938, 0.03125
        %v970 = vmul.f32 %v940, 0.03125
        %v971 = vmul.f32 %v942, 0.03125
        %v972 = vmul.f32 %v944, 0.03125
        %v973 = vmul.f32 %v946, 0.03125
        %v974 = vmul.f32 %v948, 0.03125
        %v975 = vmul.f32 %v950, 0.03125
        %v976 = vmul.f32 %v952, 0.03125
        %v977 = vmul.f32 %v954, 0.03125
        %v978 = vmul.f32 %v956, 0.03125
        %v979 = vmul.f32 %v958, 0.03125
        %v980 = vmul.f32 %v960, 0.03125
        %v981 = vmul.f32 %v962, 0.03125
        %v982 = vmul.f32 %v964, 0.03125
        %v983 = vmul.f32 %v966, 0.03125
        %v984 = vmul.f32 %v968, 0.03125
        %v985 = vsub.f32 %v858, %v969
        %v986 = vsub.f32 %v863, %v970
        %v987 = vsub.f32 %v868, %v971
        %v988 = vsub.f32 %v873, %v972
        %v989 = vsub.f32 %v878, %v973
        %v990 = vsub.f32 %v883, %v974
        %v991 = vsub.f32 %v888, %v975
        %v992 = vsub.f32 %v893, %v976
        %v993 = vsub.f32 %v898, %v977
        %v994 = vsub.f32 %v903, %v978
        %v995 = vsub.f32 %v908, %v979
        %v996 = vsub.f32 %v913, %v980
        %v997 = vsub.f32 %v918, %v981
        %v998 = vsub.f32 %v923, %v982
        %v999 = vsub.f32 %v928, %v983
        %v1000 = vsub.f32 %v933, %v984
        %v1002 = vlaneseq
        %v1003 = vshrl.u32 %v1002, 7
        %v1004 = vsub.s32 0, %v1003
        %v1005 = vrot.slane %v936, %v1004
        %v1007 = vmul.f32 %v985, %v1005
        %v1008 = vmul.f32 %v986, %v1005
        %v1009 = vmul.f32 %v987, %v1005
        %v1010 = vmul.f32 %v988, %v1005
        %v1011 = vmul.f32 %v989, %v1005
        %v1012 = vmul.f32 %v990, %v1005
        %v1013 = vmul.f32 %v991, %v1005
        %v1014 = vmul.f32 %v992, %v1005
        %v1015 = vmul.f32 %v993, %v1005
        %v1016 = vmul.f32 %v994, %v1005
        %v1017 = vmul.f32 %v995, %v1005
        %v1018 = vmul.f32 %v996, %v1005
        %v1019 = vmul.f32 %v997, %v1005
        %v1020 = vmul.f32 %v998, %v1005
        %v1021 = vmul.f32 %v999, %v1005
        %v1022 = vmul.f32 %v1000, %v1005
        %v1023 = vmul.f32 %v1007, %v1007
        %v1024 = vmul.f32 %v1008, %v1008
        %v1025 = vmul.f32 %v1009, %v1009
        %v1026 = vmul.f32 %v1010, %v1010
        %v1027 = vmul.f32 %v1011, %v1011
        %v1028 = vmul.f32 %v1012, %v1012
        %v1029 = vmul.f32 %v1013, %v1013
        %v1030 = vmul.f32 %v1014, %v1014
        %v1031 = vmul.f32 %v1015, %v1015
        %v1032 = vmul.f32 %v1016, %v1016
        %v1033 = vmul.f32 %v1017, %v1017
        %v1034 = vmul.f32 %v1018, %v1018
        %v1035 = vmul.f32 %v1019, %v1019
        %v1036 = vmul.f32 %v1020, %v1020
        %v1037 = vmul.f32 %v1021, %v1021
        %v1038 = vmul.f32 %v1022, %v1022
        %1039 = vadd.xlane.f32.xlu0 %v1023
        %v1040 = vpop.xlane.xlu0 %1039
        %1041 = vadd.xlane.f32.xlu0 %v1024
        %v1042 = vpop.xlane.xlu0 %1041
        %1043 = vadd.xlane.f32.xlu0 %v1025
        %v1044 = vpop.xlane.xlu0 %1043
        %1045 = vadd.xlane.f32.xlu0 %v1026
        %v1046 = vpop.xlane.xlu0 %1045
        %1047 = vadd.xlane.f32.xlu0 %v1027
        %v1048 = vpop.xlane.xlu0 %1047
        %1049 = vadd.xlane.f32.xlu0 %v1028
        %v1050 = vpop.xlane.xlu0 %1049
        %1051 = vadd.xlane.f32.xlu0 %v1029
        %v1052 = vpop.xlane.xlu0 %1051
        %1053 = vadd.xlane.f32.xlu0 %v1030
        %v1054 = vpop.xlane.xlu0 %1053
        %1055 = vadd.xlane.f32.xlu0 %v1031
        %v1056 = vpop.xlane.xlu0 %1055
        %1057 = vadd.xlane.f32.xlu0 %v1032
        %v1058 = vpop.xlane.xlu0 %1057
        %1059 = vadd.xlane.f32.xlu0 %v1033
        %v1060 = vpop.xlane.xlu0 %1059
        %1061 = vadd.xlane.f32.xlu0 %v1034
        %v1062 = vpop.xlane.xlu0 %1061
        %1063 = vadd.xlane.f32.xlu0 %v1035
        %v1064 = vpop.xlane.xlu0 %1063
        %1065 = vadd.xlane.f32.xlu0 %v1036
        %v1066 = vpop.xlane.xlu0 %1065
        %1067 = vadd.xlane.f32.xlu0 %v1037
        %v1068 = vpop.xlane.xlu0 %1067
        %1069 = vadd.xlane.f32.xlu0 %v1038
        %v1070 = vpop.xlane.xlu0 %1069
        %v1071 = vmul.f32 %v1040, 0.03125
        %v1072 = vmul.f32 %v1042, 0.03125
        %v1073 = vmul.f32 %v1044, 0.03125
        %v1074 = vmul.f32 %v1046, 0.03125
        %v1075 = vmul.f32 %v1048, 0.03125
        %v1076 = vmul.f32 %v1050, 0.03125
        %v1077 = vmul.f32 %v1052, 0.03125
        %v1078 = vmul.f32 %v1054, 0.03125
        %v1079 = vmul.f32 %v1056, 0.03125
        %v1080 = vmul.f32 %v1058, 0.03125
        %v1081 = vmul.f32 %v1060, 0.03125
        %v1082 = vmul.f32 %v1062, 0.03125
        %v1083 = vmul.f32 %v1064, 0.03125
        %v1084 = vmul.f32 %v1066, 0.03125
        %v1085 = vmul.f32 %v1068, 0.03125
        %v1086 = vmul.f32 %v1070, 0.03125
        %v1087 = vadd.f32 %v1071, 1e-05
        %v1088 = vadd.f32 %v1072, 1e-05
        %v1089 = vadd.f32 %v1073, 1e-05
        %v1090 = vadd.f32 %v1074, 1e-05
        %v1091 = vadd.f32 %v1075, 1e-05
        %v1092 = vadd.f32 %v1076, 1e-05
        %v1093 = vadd.f32 %v1077, 1e-05
        %v1094 = vadd.f32 %v1078, 1e-05
        %v1095 = vadd.f32 %v1079, 1e-05
        %v1096 = vadd.f32 %v1080, 1e-05
        %v1097 = vadd.f32 %v1081, 1e-05
        %v1098 = vadd.f32 %v1082, 1e-05
        %v1099 = vadd.f32 %v1083, 1e-05
        %v1100 = vadd.f32 %v1084, 1e-05
        %v1101 = vadd.f32 %v1085, 1e-05
        %v1102 = vadd.f32 %v1086, 1e-05
        %v1103 = vrsqrt.pop %v1087
        %v1104 = vrsqrt.pop %v1088
        %v1105 = vrsqrt.pop %v1089
        %v1106 = vrsqrt.pop %v1090
        %v1107 = vrsqrt.pop %v1091
        %v1108 = vrsqrt.pop %v1092
        %v1109 = vrsqrt.pop %v1093
        %v1110 = vrsqrt.pop %v1094
        %v1111 = vrsqrt.pop %v1095
        %v1112 = vrsqrt.pop %v1096
        %v1113 = vrsqrt.pop %v1097
        %v1114 = vrsqrt.pop %v1098
        %v1115 = vrsqrt.pop %v1099
        %v1116 = vrsqrt.pop %v1100
        %v1117 = vrsqrt.pop %v1101
        %v1118 = vrsqrt.pop %v1102
        %v1119 = vmul.f32 %v1007, %v1103
        %v1120 = vmul.f32 %v1008, %v1104
        %v1121 = vmul.f32 %v1009, %v1105
        %v1122 = vmul.f32 %v1010, %v1106
        %v1123 = vmul.f32 %v1011, %v1107
        %v1124 = vmul.f32 %v1012, %v1108
        %v1125 = vmul.f32 %v1013, %v1109
        %v1126 = vmul.f32 %v1014, %v1110
        %v1127 = vmul.f32 %v1015, %v1111
        %v1128 = vmul.f32 %v1016, %v1112
        %v1129 = vmul.f32 %v1017, %v1113
        %v1130 = vmul.f32 %v1018, %v1114
        %v1131 = vmul.f32 %v1019, %v1115
        %v1132 = vmul.f32 %v1020, %v1116
        %v1133 = vmul.f32 %v1021, %v1117
        %v1134 = vmul.f32 %v1022, %v1118
        %v1135 = vld [vmem:[%s6] sm:$0x1]
        %v1137 = vlaneseq
        %v1138 = vshrl.u32 %v1137, 7
        %v1139 = vsub.s32 0, %v1138
        %v1140 = vrot.slane %v1135, %v1139
        %v1142 = vmul.f32 %v1119, %v1140
        %v1143 = vmul.f32 %v1120, %v1140
        %v1144 = vmul.f32 %v1121, %v1140
        %v1145 = vmul.f32 %v1122, %v1140
        %v1146 = vmul.f32 %v1123, %v1140
        %v1147 = vmul.f32 %v1124, %v1140
        %v1148 = vmul.f32 %v1125, %v1140
        %v1149 = vmul.f32 %v1126, %v1140
        %v1150 = vmul.f32 %v1127, %v1140
        %v1151 = vmul.f32 %v1128, %v1140
        %v1152 = vmul.f32 %v1129, %v1140
        %v1153 = vmul.f32 %v1130, %v1140
        %v1154 = vmul.f32 %v1131, %v1140
        %v1155 = vmul.f32 %v1132, %v1140
        %v1156 = vmul.f32 %v1133, %v1140
        %v1157 = vmul.f32 %v1134, %v1140
        %v1158 = vld [vmem:[%s7] sm:$0x1]
        %v1160 = vlaneseq
        %v1161 = vshrl.u32 %v1160, 7
        %v1162 = vsub.s32 0, %v1161
        %v1163 = vrot.slane %v1158, %v1162
        %v1165 = vadd.f32 %v1142, %v1163
        %v1166 = vadd.f32 %v1143, %v1163
        %v1167 = vadd.f32 %v1144, %v1163
        %v1168 = vadd.f32 %v1145, %v1163
        %v1169 = vadd.f32 %v1146, %v1163
        %v1170 = vadd.f32 %v1147, %v1163
        %v1171 = vadd.f32 %v1148, %v1163
        %v1172 = vadd.f32 %v1149, %v1163
        %v1173 = vadd.f32 %v1150, %v1163
        %v1174 = vadd.f32 %v1151, %v1163
        %v1175 = vadd.f32 %v1152, %v1163
        %v1176 = vadd.f32 %v1153, %v1163
        %v1177 = vadd.f32 %v1154, %v1163
        %v1178 = vadd.f32 %v1155, %v1163
        %v1179 = vadd.f32 %v1156, %v1163
        %v1180 = vadd.f32 %v1157, %v1163
        %vm1181 = vcmp.ge.f32.partialorder %v1165, 0.0
        %vm1182 = vcmp.ge.f32.partialorder %v1166, 0.0
        %vm1183 = vcmp.ge.f32.partialorder %v1167, 0.0
        %vm1184 = vcmp.ge.f32.partialorder %v1168, 0.0
        %vm1185 = vcmp.ge.f32.partialorder %v1169, 0.0
        %vm1186 = vcmp.ge.f32.partialorder %v1170, 0.0
        %vm1187 = vcmp.ge.f32.partialorder %v1171, 0.0
        %vm1188 = vcmp.ge.f32.partialorder %v1172, 0.0
        %vm1189 = vcmp.ge.f32.partialorder %v1173, 0.0
        %vm1190 = vcmp.ge.f32.partialorder %v1174, 0.0
        %vm1191 = vcmp.ge.f32.partialorder %v1175, 0.0
        %vm1192 = vcmp.ge.f32.partialorder %v1176, 0.0
        %vm1193 = vcmp.ge.f32.partialorder %v1177, 0.0
        %vm1194 = vcmp.ge.f32.partialorder %v1178, 0.0
        %vm1195 = vcmp.ge.f32.partialorder %v1179, 0.0
        %vm1196 = vcmp.ge.f32.partialorder %v1180, 0.0
        %v1197 = vstv %s534
        %v1198 = vmul.f32 %v1197, %v1165
        %v1199 = vmul.f32 %v1197, %v1166
        %v1200 = vmul.f32 %v1197, %v1167
        %v1201 = vmul.f32 %v1197, %v1168
        %v1202 = vmul.f32 %v1197, %v1169
        %v1203 = vmul.f32 %v1197, %v1170
        %v1204 = vmul.f32 %v1197, %v1171
        %v1205 = vmul.f32 %v1197, %v1172
        %v1206 = vmul.f32 %v1197, %v1173
        %v1207 = vmul.f32 %v1197, %v1174
        %v1208 = vmul.f32 %v1197, %v1175
        %v1209 = vmul.f32 %v1197, %v1176
        %v1210 = vmul.f32 %v1197, %v1177
        %v1211 = vmul.f32 %v1197, %v1178
        %v1212 = vmul.f32 %v1197, %v1179
        %v1213 = vmul.f32 %v1197, %v1180
        %v1214 = vsel %vm1181, %v1165, %v1198
        %v1215 = vsel %vm1182, %v1166, %v1199
        %v1216 = vsel %vm1183, %v1167, %v1200
        %v1217 = vsel %vm1184, %v1168, %v1201
        %v1218 = vsel %vm1185, %v1169, %v1202
        %v1219 = vsel %vm1186, %v1170, %v1203
        %v1220 = vsel %vm1187, %v1171, %v1204
        %v1221 = vsel %vm1188, %v1172, %v1205
        %v1222 = vsel %vm1189, %v1173, %v1206
        %v1223 = vsel %vm1190, %v1174, %v1207
        %v1224 = vsel %vm1191, %v1175, %v1208
        %v1225 = vsel %vm1192, %v1176, %v1209
        %v1226 = vsel %vm1193, %v1177, %v1210
        %v1227 = vsel %vm1194, %v1178, %v1211
        %v1228 = vsel %vm1195, %v1179, %v1212
        %v1229 = vsel %vm1196, %v1180, %v1213
        %v1230 = vld [vmem:[#allocation10] sm:$0xff]
        %v1231 = vld [vmem:[#allocation10 + $0x8] sm:$0xff]
        %v1232 = vld [vmem:[#allocation10 + $0x10] sm:$0xff]
        %v1233 = vld [vmem:[#allocation10 + $0x18] sm:$0xff]
        %v1234 = vld [vmem:[#allocation10 + $0x20] sm:$0xff]
        %v1235 = vld [vmem:[#allocation10 + $0x28] sm:$0xff]
        %v1236 = vld [vmem:[#allocation10 + $0x30] sm:$0xff]
        %v1237 = vld [vmem:[#allocation10 + $0x38] sm:$0xff]
        %v1238 = vld [vmem:[#allocation10 + $0x40] sm:$0xff]
        %v1239 = vld [vmem:[#allocation10 + $0x48] sm:$0xff]
        %v1240 = vld [vmem:[#allocation10 + $0x50] sm:$0xff]
        %v1241 = vld [vmem:[#allocation10 + $0x58] sm:$0xff]
        %v1242 = vld [vmem:[#allocation10 + $0x60] sm:$0xff]
        %v1243 = vld [vmem:[#allocation10 + $0x68] sm:$0xff]
        %v1244 = vld [vmem:[#allocation10 + $0x70] sm:$0xff]
        %v1245 = vld [vmem:[#allocation10 + $0x78] sm:$0xff]
        %v1246 = vld [vmem:[#allocation10 + $0x80] sm:$0xff]
        %v1247 = vld [vmem:[#allocation10 + $0x88] sm:$0xff]
        %v1248 = vld [vmem:[#allocation10 + $0x90] sm:$0xff]
        %v1249 = vld [vmem:[#allocation10 + $0x98] sm:$0xff]
        %v1250 = vld [vmem:[#allocation10 + $0xa0] sm:$0xff]
        %v1251 = vld [vmem:[#allocation10 + $0xa8] sm:$0xff]
        %v1252 = vld [vmem:[#allocation10 + $0xb0] sm:$0xff]
        %v1253 = vld [vmem:[#allocation10 + $0xb8] sm:$0xff]
        %v1254 = vld [vmem:[#allocation10 + $0xc0] sm:$0xff]
        %v1255 = vld [vmem:[#allocation10 + $0xc8] sm:$0xff]
        %v1256 = vld [vmem:[#allocation10 + $0xd0] sm:$0xff]
        %v1257 = vld [vmem:[#allocation10 + $0xd8] sm:$0xff]
        %v1258 = vld [vmem:[#allocation10 + $0xe0] sm:$0xff]
        %v1259 = vld [vmem:[#allocation10 + $0xe8] sm:$0xff]
        %v1260 = vld [vmem:[#allocation10 + $0xf0] sm:$0xff]
        %v1261 = vld [vmem:[#allocation10 + $0xf8] sm:$0xff]
        %1262 = vmatprep.subr.mxu0 %v1231
        %1263 = vmatpush1.msra.mxu0 %v1230
        %1264 = vmatprep.subr.mxu0 %v1233
        %1265 = vmatpush1.msra.mxu0 %v1232
        %1266 = vmatprep.subr.mxu0 %v1235
        %1267 = vmatpush1.msra.mxu0 %v1234
        %1268 = vmatprep.subr.mxu0 %v1237
        %1269 = vmatpush1.msra.mxu0 %v1236
        %1270 = vmatprep.subr.mxu0 %v1239
        %1271 = vmatpush1.msra.mxu0 %v1238
        %1272 = vmatprep.subr.mxu0 %v1241
        %1273 = vmatpush1.msra.mxu0 %v1240
        %1274 = vmatprep.subr.mxu0 %v1243
        %1275 = vmatpush1.msra.mxu0 %v1242
        %1276 = vmatprep.subr.mxu0 %v1245
        %1277 = vmatpush1.msra.mxu0 %v1244
        %1278 = vmatprep.subr.mxu0 %v1247
        %1279 = vmatpush1.msra.mxu0 %v1246
        %1280 = vmatprep.subr.mxu0 %v1249
        %1281 = vmatpush1.msra.mxu0 %v1248
        %1282 = vmatprep.subr.mxu0 %v1251
        %1283 = vmatpush1.msra.mxu0 %v1250
        %1284 = vmatprep.subr.mxu0 %v1253
        %1285 = vmatpush1.msra.mxu0 %v1252
        %1286 = vmatprep.subr.mxu0 %v1255
        %1287 = vmatpush1.msra.mxu0 %v1254
        %1288 = vmatprep.subr.mxu0 %v1257
        %1289 = vmatpush1.msra.mxu0 %v1256
        %1290 = vmatprep.subr.mxu0 %v1259
        %1291 = vmatpush1.msra.mxu0 %v1258
        %1292 = vmatprep.subr.mxu0 %v1261
        %1293 = vmatpush1.msra.mxu0 %v1260
        %1294 = vmatprep.subr.mxu0 0.0
        %1295 = vmatpush1.msra.mxu0 0.0
        %1296 = vmatprep.subr.mxu0 0.0
        %1297 = vmatpush1.msra.mxu0 0.0
        %1298 = vmatprep.subr.mxu0 0.0
        %1299 = vmatpush1.msra.mxu0 0.0
        %1300 = vmatprep.subr.mxu0 0.0
        %1301 = vmatpush1.msra.mxu0 0.0
        %1302 = vmatprep.subr.mxu0 0.0
        %1303 = vmatpush1.msra.mxu0 0.0
        %1304 = vmatprep.subr.mxu0 0.0
        %1305 = vmatpush1.msra.mxu0 0.0
        %1306 = vmatprep.subr.mxu0 0.0
        %1307 = vmatpush1.msra.mxu0 0.0
        %1308 = vmatprep.subr.mxu0 0.0
        %1309 = vmatpush1.msra.mxu0 0.0
        %1310 = vmatprep.subr.mxu0 0.0
        %1311 = vmatpush1.msra.mxu0 0.0
        %1312 = vmatprep.subr.mxu0 0.0
        %1313 = vmatpush1.msra.mxu0 0.0
        %1314 = vmatprep.subr.mxu0 0.0
        %1315 = vmatpush1.msra.mxu0 0.0
        %1316 = vmatprep.subr.mxu0 0.0
        %1317 = vmatpush1.msra.mxu0 0.0
        %1318 = vmatprep.subr.mxu0 0.0
        %1319 = vmatpush1.msra.mxu0 0.0
        %1320 = vmatprep.subr.mxu0 0.0
        %1321 = vmatpush1.msra.mxu0 0.0
        %1322 = vmatprep.subr.mxu0 0.0
        %1323 = vmatpush1.msra.mxu0 0.0
        %1324 = vmatprep.subr.mxu0 0.0
        %1325 = vmatpush1.msra.mxu0 0.0
        %1326 = vmatprep.mubr.f32.mxu0 0.0
        %1327 = vmatmul.mubr.f32.gmra.mrb[0].mxu0 %v1214
        %v1328 = vpop.f32.mrb[0].mxu0
        %v1329 = vadd.f32 0.0, %v1328
        %v1330 = vpop.f32.mrb[0].mxu0
        %v1331 = vadd.f32 0.0, %v1330
        %1332 = vmatprep.mubr.f32.mxu0 0.0
        %1333 = vmatmul.mubr.f32.gmra.mrb[0].mxu0 %v1215
        %v1334 = vpop.f32.mrb[0].mxu0
        %v1335 = vadd.f32 0.0, %v1334
        %v1336 = vpop.f32.mrb[0].mxu0
        %v1337 = vadd.f32 0.0, %v1336
        %1338 = vmatprep.mubr.f32.mxu0 0.0
        %1339 = vmatmul.mubr.f32.gmra.mrb[0].mxu0 %v1216
        %v1340 = vpop.f32.mrb[0].mxu0
        %v1341 = vadd.f32 0.0, %v1340
        %v1342 = vpop.f32.mrb[0].mxu0
        %v1343 = vadd.f32 0.0, %v1342
        %1344 = vmatprep.mubr.f32.mxu0 0.0
        %1345 = vmatmul.mubr.f32.gmra.mrb[0].mxu0 %v1217
        %v1346 = vpop.f32.mrb[0].mxu0
        %v1347 = vadd.f32 0.0, %v1346
        %v1348 = vpop.f32.mrb[0].mxu0
        %v1349 = vadd.f32 0.0, %v1348
        %1350 = vmatprep.mubr.f32.mxu0 0.0
        %1351 = vmatmul.mubr.f32.gmra.mrb[0].mxu0 %v1218
        %v1352 = vpop.f32.mrb[0].mxu0
        %v1353 = vadd.f32 0.0, %v1352
        %v1354 = vpop.f32.mrb[0].mxu0
        %v1355 = vadd.f32 0.0, %v1354
        %1356 = vmatprep.mubr.f32.mxu0 0.0
        %1357 = vmatmul.mubr.f32.gmra.mrb[0].mxu0 %v1219
        %v1358 = vpop.f32.mrb[0].mxu0
        %v1359 = vadd.f32 0.0, %v1358
        %v1360 = vpop.f32.mrb[0].mxu0
        %v1361 = vadd.f32 0.0, %v1360
        %1362 = vmatprep.mubr.f32.mxu0 0.0
        %1363 = vmatmul.mubr.f32.gmra.mrb[0].mxu0 %v1220
        %v1364 = vpop.f32.mrb[0].mxu0
        %v1365 = vadd.f32 0.0, %v1364
        %v1366 = vpop.f32.mrb[0].mxu0
        %v1367 = vadd.f32 0.0, %v1366
        %1368 = vmatprep.mubr.f32.mxu0 0.0
        %1369 = vmatmul.mubr.f32.gmra.mrb[0].mxu0 %v1221
        %v1370 = vpop.f32.mrb[0].mxu0
        %v1371 = vadd.f32 0.0, %v1370
        %v1372 = vpop.f32.mrb[0].mxu0
        %v1373 = vadd.f32 0.0, %v1372
        %1374 = vmatprep.mubr.f32.mxu0 0.0
        %1375 = vmatmul.mubr.f32.gmra.mrb[0].mxu0 %v1222
        %v1376 = vpop.f32.mrb[0].mxu0
        %v1377 = vadd.f32 0.0, %v1376
        %v1378 = vpop.f32.mrb[0].mxu0
        %v1379 = vadd.f32 0.0, %v1378
        %1380 = vmatprep.mubr.f32.mxu0 0.0
        %1381 = vmatmul.mubr.f32.gmra.mrb[0].mxu0 %v1223
        %v1382 = vpop.f32.mrb[0].mxu0
        %v1383 = vadd.f32 0.0, %v1382
        %v1384 = vpop.f32.mrb[0].mxu0
        %v1385 = vadd.f32 0.0, %v1384
        %1386 = vmatprep.mubr.f32.mxu0 0.0
        %1387 = vmatmul.mubr.f32.gmra.mrb[0].mxu0 %v1224
        %v1388 = vpop.f32.mrb[0].mxu0
        %v1389 = vadd.f32 0.0, %v1388
        %v1390 = vpop.f32.mrb[0].mxu0
        %v1391 = vadd.f32 0.0, %v1390
        %1392 = vmatprep.mubr.f32.mxu0 0.0
        %1393 = vmatmul.mubr.f32.gmra.mrb[0].mxu0 %v1225
        %v1394 = vpop.f32.mrb[0].mxu0
        %v1395 = vadd.f32 0.0, %v1394
        %v1396 = vpop.f32.mrb[0].mxu0
        %v1397 = vadd.f32 0.0, %v1396
        %1398 = vmatprep.mubr.f32.mxu0 0.0
        %1399 = vmatmul.mubr.f32.gmra.mrb[0].mxu0 %v1226
        %v1400 = vpop.f32.mrb[0].mxu0
        %v1401 = vadd.f32 0.0, %v1400
        %v1402 = vpop.f32.mrb[0].mxu0
        %v1403 = vadd.f32 0.0, %v1402
        %1404 = vmatprep.mubr.f32.mxu0 0.0
        %1405 = vmatmul.mubr.f32.gmra.mrb[0].mxu0 %v1227
        %v1406 = vpop.f32.mrb[0].mxu0
        %v1407 = vadd.f32 0.0, %v1406
        %v1408 = vpop.f32.mrb[0].mxu0
        %v1409 = vadd.f32 0.0, %v1408
        %1410 = vmatprep.mubr.f32.mxu0 0.0
        %1411 = vmatmul.mubr.f32.gmra.mrb[0].mxu0 %v1228
        %v1412 = vpop.f32.mrb[0].mxu0
        %v1413 = vadd.f32 0.0, %v1412
        %v1414 = vpop.f32.mrb[0].mxu0
        %v1415 = vadd.f32 0.0, %v1414
        %1416 = vmatprep.mubr.f32.mxu0 0.0
        %1417 = vmatmul.mubr.f32.gmra.mrb[0].mxu0 %v1229
        %v1418 = vpop.f32.mrb[0].mxu0
        %v1419 = vadd.f32 0.0, %v1418
        %v1420 = vpop.f32.mrb[0].mxu0
        %v1421 = vadd.f32 0.0, %v1420
        %1422 = vdwg.mxu0
        %v1423 = vld [vmem:[%s524] sm:$0x1]
        %v1424 = vlaneseq
        %v1425 = vshrl.u32 %v1424, 7
        %v1426 = vlaneseq
        %v1427 = vshrl.u32 %v1426, 7
        %v1428 = vsub.s32 0, %v1427
        %v1429 = vrot.slane %v1423, %v1428
        %vm1430 = vcmp.eq.s32.totalorder %v1425, %v1429
        %v1431 = vsel %vm1430, 1, 0
        %v1432 = vcvt.s32.f32 %v1431
        %1433 = vmatprep.subr.mxu0 %v1331
        %1434 = vmatpush1.msra.mxu0 %v1329
        %1435 = vmatprep.subr.mxu0 %v1337
        %1436 = vmatpush1.msra.mxu0 %v1335
        %1437 = vmatprep.subr.mxu0 %v1343
        %1438 = vmatpush1.msra.mxu0 %v1341
        %1439 = vmatprep.subr.mxu0 %v1349
        %1440 = vmatpush1.msra.mxu0 %v1347
        %1441 = vmatprep.subr.mxu0 %v1355
        %1442 = vmatpush1.msra.mxu0 %v1353
        %1443 = vmatprep.subr.mxu0 %v1361
        %1444 = vmatpush1.msra.mxu0 %v1359
        %1445 = vmatprep.subr.mxu0 %v1367
        %1446 = vmatpush1.msra.mxu0 %v1365
        %1447 = vmatprep.subr.mxu0 %v1373
        %1448 = vmatpush1.msra.mxu0 %v1371
        %1449 = vmatprep.subr.mxu0 %v1379
        %1450 = vmatpush1.msra.mxu0 %v1377
        %1451 = vmatprep.subr.mxu0 %v1385
        %1452 = vmatpush1.msra.mxu0 %v1383
        %1453 = vmatprep.subr.mxu0 %v1391
        %1454 = vmatpush1.msra.mxu0 %v1389
        %1455 = vmatprep.subr.mxu0 %v1397
        %1456 = vmatpush1.msra.mxu0 %v1395
        %1457 = vmatprep.subr.mxu0 %v1403
        %1458 = vmatpush1.msra.mxu0 %v1401
        %1459 = vmatprep.subr.mxu0 %v1409
        %1460 = vmatpush1.msra.mxu0 %v1407
        %1461 = vmatprep.subr.mxu0 %v1415
        %1462 = vmatpush1.msra.mxu0 %v1413
        %1463 = vmatprep.subr.mxu0 %v1421
        %1464 = vmatpush1.msra.mxu0 %v1419
        %1465 = vmatprep.subr.mxu0 0.0
        %1466 = vmatpush1.msra.mxu0 0.0
        %1467 = vmatprep.subr.mxu0 0.0
        %1468 = vmatpush1.msra.mxu0 0.0
        %1469 = vmatprep.subr.mxu0 0.0
        %1470 = vmatpush1.msra.mxu0 0.0
        %1471 = vmatprep.subr.mxu0 0.0
        %1472 = vmatpush1.msra.mxu0 0.0
        %1473 = vmatprep.subr.mxu0 0.0
        %1474 = vmatpush1.msra.mxu0 0.0
        %1475 = vmatprep.subr.mxu0 0.0
        %1476 = vmatpush1.msra.mxu0 0.0
        %1477 = vmatprep.subr.mxu0 0.0
        %1478 = vmatpush1.msra.mxu0 0.0
        %1479 = vmatprep.subr.mxu0 0.0
        %1480 = vmatpush1.msra.mxu0 0.0
        %1481 = vmatprep.subr.mxu0 0.0
        %1482 = vmatpush1.msra.mxu0 0.0
        %1483 = vmatprep.subr.mxu0 0.0
        %1484 = vmatpush1.msra.mxu0 0.0
        %1485 = vmatprep.subr.mxu0 0.0
        %1486 = vmatpush1.msra.mxu0 0.0
        %1487 = vmatprep.subr.mxu0 0.0
        %1488 = vmatpush1.msra.mxu0 0.0
        %1489 = vmatprep.subr.mxu0 0.0
        %1490 = vmatpush1.msra.mxu0 0.0
        %1491 = vmatprep.subr.mxu0 0.0
        %1492 = vmatpush1.msra.mxu0 0.0
        %1493 = vmatprep.subr.mxu0 0.0
        %1494 = vmatpush1.msra.mxu0 0.0
        %1495 = vmatprep.subr.mxu0 0.0
        %1496 = vmatpush1.msra.mxu0 0.0
        %1497 = vmatprep.mubr.f32.mxu0 0.0
        %1498 = vmatmul.mubr.f32.gmra.mrb[0].mxu0 %v1432
        %v1499 = vpop.f32.mrb[0].mxu0
        %v1500 = vadd.f32 0.0, %v1499
        %v1501 = vpop.f32.mrb[0].mxu0
        %v1502 = vadd.f32 0.0, %v1501
        %1503 = vdwg.mxu0
        %v1504 = vld [vmem:[%s516] sm:$0xff]
        %v1505 = vld [vmem:[%s516 + $0x8] sm:$0xff]
        %v1506 = vadd.f32 %v1504, %v1500
        %v1507 = vadd.f32 %v1505, %v1502
        %1508 = vst [vmem:[%s516] sm:$0xff] %v1506
        %1509 = vst [vmem:[%s516 + $0x8] sm:$0xff] %v1507
        %s1510 = sand.u32 %s323, 1
        %s1511 = scalar_lea.sflag [#allocation6], %s1510
        %s1512 = sand.u32 %s323, 1
        %s1513 = smul.addr %s1512, 16
        %s1514 = scalar_lea.vmem [#allocation12], %s1513
        // Predicated region
        $region89: #{tpu_custom_call.1} parent=67 // pred_check
          %p1515 = pneg %p333
        $region90: #{tpu_custom_call.1} parent=67 // pred_check_branch
          %1517 = sbr.rel (%p1515) target = $region92
        $region91: #{tpu_custom_call.1} parent=67 // pred_region
          %s1519 = ssub.s32 256, 256
          %1520 = vsyncadd %s1511, %s1519
          %s1521 = smul.addr %s37, 2
          %s1522 = smul.addr %s1521, 128
          %s1523 = scalar_lea.hbm %s12, %s1522
          %s1525 = sshll.u32 %s1514, 4
          %s1526 = int_to_ptr.vmem [resolvable:$true] %s1525
          %1528 = dma.vmem_to_hbm [thread:$0]  %s1526, 256, %s1523, %s1511
        $region92: #{tpu_custom_call.1} parent=67 // pred_fallthru
          _
      $region68: #{tpu_custom_call.1} parent=5 // pred_fallthru
        _
      %p1529 = scmp.le.s32.totalorder 2, %s28
      // Predicated region
      $region93: #{tpu_custom_call.1} parent=5 // pred_check
        %p1530 = pneg %p1529
      $region94: #{tpu_custom_call.1} parent=5 // pred_check_branch
        %1532 = sbr.rel (%p1530) target = $region96
      $region95: #{tpu_custom_call.1} parent=5 // pred_region
        %s1533 = ssub.s32 %s28, 2
        // Predicated region
        $region97: #{tpu_custom_call.1} parent=95 // pred_check
          %p1534 = pneg %p339
        $region98: #{tpu_custom_call.1} parent=95 // pred_check_branch
          %1536 = sbr.rel (%p1534) target = $region100
        $region99: #{tpu_custom_call.1} parent=95 // pred_region
          %s1537 = sand.u32 %s324, 1
          %s1538 = scalar_lea.sflag [#allocation6], %s1537
          %s1539 = sand.u32 %s324, 1
          %s1540 = smul.addr %s1539, 16
          %s1541 = scalar_lea.vmem [#allocation12], %s1540
          %1542 = dma.done %s1538, 256
        $region100: #{tpu_custom_call.1} parent=95 // pred_fallthru
          _
      $region96: #{tpu_custom_call.1} parent=5 // pred_fallthru
        _
    $region6: #{tpu_custom_call.1} parent=1 // loop_footer
      %s32 = sadd.s32 1, %s28
    $region7: #{tpu_custom_call.1} parent=1 // loop_footer_branch
      %27 = sbr.rel target = $region3
    $region8: #{tpu_custom_call.1} parent=1 // loop_exit
      _
    %1543 = vsyncpa [#allocation5], 1
    %s1544 = scalar_lea.sflag [#allocation5], 1
    %1545 = vsyncpa %s1544, 1
    %1546 = vsyncpa [#allocation8], 1
    %1547 = vsyncpa [#allocation11], 1
    %1548 = vsyncpa [#allocation6], 1
    %s1549 = scalar_lea.sflag [#allocation6], 1
    %1550 = vsyncpa %s1549, 1

</llo_original>
